<compile_context>
chip_gen: v7x
topology: tpu7x:2x2x1
jax: 0.10.0
libtpu: 0.0.40
codegen_flags: <defaults>
</compile_context>

<pallas_src>
import jax
import jax.numpy as jnp
from jax.experimental import pallas as pl
from jax.experimental.pallas import tpu as pltpu


# ----------------------------------------------------------------------------
# Fused kernel: all GRU layers + FC + sigmoid, single invocation, all in VMEM.
# ----------------------------------------------------------------------------
def _make_gru_net_kernel(num_layers, hidden_size, batch, seq_len):
    H, B, T = hidden_size, batch, seq_len

    def kernel(*refs):
        # refs = x_tm, (wih, whh, gbias, bhn) * num_layers, fc_w, fc_b, out
        x_ref = refs[0]                                   # (T*B, In) time-major
        layer_refs = refs[1:1 + 4 * num_layers]
        fcw_ref = refs[1 + 4 * num_layers]                # (H, O)
        fcb_ref = refs[2 + 4 * num_layers]                # (1, O)
        out_ref = refs[3 + 4 * num_layers]                # (T*B, O) time-major

        xin = x_ref[...]                                  # time-major rows t*B + b
        for l in range(num_layers):
            wih = layer_refs[4 * l + 0][...]              # (in_dim, 3H)
            whh = layer_refs[4 * l + 1][...]              # (H, 3H)
            gb = layer_refs[4 * l + 2][...]               # (1, 3H) = [bir+bhr|biz+bhz|bin]
            bhn = layer_refs[4 * l + 3][...]              # (1, H)  = b_hn

            # ---- hoisted input projection for ALL timesteps (off the chain),
            #      with the r/z hidden biases pre-folded into gb.
            gx_all = (
                jnp.dot(xin, wih, preferred_element_type=jnp.float32) + gb
            )                                             # (T*B, 3H)
            # hoisted broadcast of b_hn (JAX does not CSE broadcast_in_dim)
            bhn_b = jnp.broadcast_to(bhn, (B, H))

            # ---- recurrence over time (fully unrolled, static contiguous slices)
            h = jnp.zeros((B, H), jnp.float32)
            hs = []
            for t in range(T):
                gx_t = gx_all[t * B:(t + 1) * B, :]       # contiguous (B, 3H)
                # single fused hidden projection: 1 MXU matmul per step (no bias)
                gh = jnp.dot(h, whh, preferred_element_type=jnp.float32)
                # one EUP push for r and z together
                rz = jax.nn.sigmoid(gx_t[:, :2 * H] + gh[:, :2 * H])
                r = rz[:, :H]
                z = rz[:, H:]
                n = jnp.tanh(gx_t[:, 2 * H:] + r * (gh[:, 2 * H:] + bhn_b))
                h = (1.0 - z) * n + z * h
                hs.append(h)

            # one batched time-major assembly per layer (off the serial chain)
            xin = jnp.concatenate(hs, axis=0)             # (T*B, H)

        # ---- FC + sigmoid epilogue: one matmul, one store
        y = jax.nn.sigmoid(
            jnp.dot(xin, fcw_ref[...], preferred_element_type=jnp.float32)
            + fcb_ref[...])                               # (T*B, O)
        out_ref[...] = y.astype(out_ref.dtype)

    return kernel


@jax.jit
def gru_net_forward(x, params):
    """x: (B, T, input_size) batch-first. Returns sigmoid(fc(gru(x))) of shape
    (B, T, num_objects), matching the PyTorch module."""
    B, T, In = x.shape
    gru_params = params["gru"]
    num_layers = len(gru_params)
    H = gru_params[0][1].shape[0]            # whh: (H, 3H)
    fc_w, fc_b = params["fc"]
    O = fc_w.shape[-1]

    # tiny off-kernel XLA transpose: batch-first -> time-major flattened rows
    x_tm = jnp.swapaxes(x, 0, 1).reshape(T * B, In)

    # fold b_hr/b_hz into the hoisted input-projection bias; keep b_hn separate
    flat = []
    for (wih, whh, bih, bhh) in gru_params:
        gb = bih + jnp.concatenate(
            [bhh[:, :2 * H], jnp.zeros((1, H), bhh.dtype)], axis=1)
        bhn = bhh[:, 2 * H:]
        flat += [wih, whh, gb, bhn]

    n_in = 1 + 4 * num_layers + 2
    kernel = _make_gru_net_kernel(num_layers, H, B, T)
    y = pl.pallas_call(
        kernel,
        out_shape=jax.ShapeDtypeStruct((T * B, O), jnp.float32),
        in_specs=[pl.BlockSpec(memory_space=pltpu.MemorySpace.VMEM)] * n_in,
        out_specs=pl.BlockSpec(memory_space=pltpu.MemorySpace.VMEM),
        compiler_params=pltpu.CompilerParams(
            vmem_limit_bytes=32 * 1024 * 1024),
    )(x_tm, *flat, fc_w, fc_b)

    # time-major (T,B,O) -> batch-first (B,T,O), off the kernel
    return jnp.swapaxes(y.reshape(T, B, O), 0, 1)


# ----------------------------------------------------------------------------
# Parameter init (PyTorch-style uniform(-1/sqrt(H), 1/sqrt(H)); concatenated
# gate layout: columns [r | z | n]).
# ----------------------------------------------------------------------------
def init_params(key, input_size, hidden_size, num_layers, num_objects):
    params = {"gru": [], "fc": None}
    k = 1.0 / jnp.sqrt(jnp.float32(hidden_size))
    for layer in range(num_layers):
        in_dim = input_size if layer == 0 else hidden_size
        key, k1, k2, k3, k4 = jax.random.split(key, 5)
        wih = jax.random.uniform(k1, (in_dim, 3 * hidden_size), jnp.float32, -k, k)
        whh = jax.random.uniform(k2, (hidden_size, 3 * hidden_size), jnp.float32, -k, k)
        bih = jax.random.uniform(k3, (1, 3 * hidden_size), jnp.float32, -k, k)
        bhh = jax.random.uniform(k4, (1, 3 * hidden_size), jnp.float32, -k, k)
        params["gru"].append((wih, whh, bih, bhh))
    key, k1, k2 = jax.random.split(key, 3)
    fc_w = jax.random.uniform(k1, (hidden_size, num_objects), jnp.float32, -k, k)
    fc_b = jax.random.uniform(k2, (1, num_objects), jnp.float32, -k, k)
    params["fc"] = (fc_w, fc_b)
    return params


# ----------------------------------------------------------------------------
# Pure-JAX reference (same math) for a correctness check.
# ----------------------------------------------------------------------------
def gru_net_reference(x, params):
    B, T, _ = x.shape
    seq = x
    for (wih, whh, bih, bhh) in params["gru"]:
        H = whh.shape[0]

        def step(h, x_t):
            gx = x_t @ wih + bih
            gh = h @ whh + bhh
            r = jax.nn.sigmoid(gx[:, :H] + gh[:, :H])
            z = jax.nn.sigmoid(gx[:, H:2 * H] + gh[:, H:2 * H])
            n = jnp.tanh(gx[:, 2 * H:] + r * gh[:, 2 * H:])
            h_new = (1.0 - z) * n + z * h
            return h_new, h_new

        h0 = jnp.zeros((B, H), jnp.float32)
        _, ys = jax.lax.scan(step, h0, jnp.swapaxes(seq, 0, 1))  # (T, B, H)
        seq = jnp.swapaxes(ys, 0, 1)
    fc_w, fc_b = params["fc"]
    return jax.nn.sigmoid(seq @ fc_w + fc_b)


if __name__ == "__main__":
    input_size = 16
    hidden_size = 32
    num_layers = 2
    num_objects = 4
    batch, seq = 2, 8

    key = jax.random.PRNGKey(0)
    key, kx = jax.random.split(key)
    x = jax.random.normal(kx, (batch, seq, input_size), jnp.float32)
    params = init_params(key, input_size, hidden_size, num_layers, num_objects)

    out = gru_net_forward(x, params)
    jax.block_until_ready(out)

    assert out.shape == (batch, seq, num_objects)
    assert bool(jnp.all(jnp.isfinite(out)))
    ref = gru_net_reference(x, params)
    assert bool(jnp.allclose(out, ref, atol=1e-4, rtol=1e-4))
    print("KERNEL_OK")
</pallas_src>

<mosaic_0001>
module attributes {stable_mosaic.version = 11 : i64} {
  func.func @kernel(%arg0: memref<16x16xf32, #tpu.memory_space<vmem>>, %arg1: memref<16x96xf32, #tpu.memory_space<vmem>>, %arg2: memref<32x96xf32, #tpu.memory_space<vmem>>, %arg3: memref<1x96xf32, #tpu.memory_space<vmem>>, %arg4: memref<1x32xf32, #tpu.memory_space<vmem>>, %arg5: memref<32x96xf32, #tpu.memory_space<vmem>>, %arg6: memref<32x96xf32, #tpu.memory_space<vmem>>, %arg7: memref<1x96xf32, #tpu.memory_space<vmem>>, %arg8: memref<1x32xf32, #tpu.memory_space<vmem>>, %arg9: memref<32x4xf32, #tpu.memory_space<vmem>>, %arg10: memref<1x4xf32, #tpu.memory_space<vmem>>, %arg11: memref<16x4xf32, #tpu.memory_space<vmem>>) attributes {dimension_semantics = [], scalar_prefetch = 0 : i64, scratch_operands = 0 : i64, tpu.core_type = #tpu.core_type<tc>} {
    %c0 = arith.constant 0 : index
    %c0_0 = arith.constant 0 : index
    %0 = vector.load %arg0[%c0, %c0_0] : memref<16x16xf32, #tpu.memory_space<vmem>>, vector<16x16xf32>
    %c0_1 = arith.constant 0 : index
    %c0_2 = arith.constant 0 : index
    %1 = vector.load %arg1[%c0_1, %c0_2] : memref<16x96xf32, #tpu.memory_space<vmem>>, vector<16x96xf32>
    %c0_3 = arith.constant 0 : index
    %c0_4 = arith.constant 0 : index
    %2 = vector.load %arg2[%c0_3, %c0_4] : memref<32x96xf32, #tpu.memory_space<vmem>>, vector<32x96xf32>
    %c0_5 = arith.constant 0 : index
    %c0_6 = arith.constant 0 : index
    %3 = vector.load %arg3[%c0_5, %c0_6] : memref<1x96xf32, #tpu.memory_space<vmem>>, vector<1x96xf32>
    %c0_7 = arith.constant 0 : index
    %c0_8 = arith.constant 0 : index
    %4 = vector.load %arg4[%c0_7, %c0_8] : memref<1x32xf32, #tpu.memory_space<vmem>>, vector<1x32xf32>
    %cst = arith.constant dense<0.000000e+00> : vector<16x96xf32>
    %5 = tpu.matmul %0, %1, %cst {dimension_numbers = #tpu.dot_dimension_numbers<[1], [0], [0], [1], [0, 0, 1, 1], [], []>} : vector<16x16xf32>, vector<16x96xf32>, vector<16x96xf32> -> vector<16x96xf32>
    %6 = vector.broadcast %3 : vector<1x96xf32> to vector<16x96xf32>
    %7 = arith.addf %5, %6 : vector<16x96xf32>
    %8 = vector.shape_cast %4 : vector<1x32xf32> to vector<1x32xf32>
    %9 = vector.broadcast %8 : vector<1x32xf32> to vector<2x32xf32>
    %cst_9 = arith.constant 0.000000e+00 : f32
    %10 = vector.broadcast %cst_9 : f32 to vector<2x32xf32>
    %11 = vector.extract_strided_slice %7 {offsets = [0, 0], sizes = [2, 96], strides = [1, 1]} : vector<16x96xf32> to vector<2x96xf32>
    %cst_10 = arith.constant dense<0.000000e+00> : vector<2x96xf32>
    %12 = tpu.matmul %10, %2, %cst_10 {dimension_numbers = #tpu.dot_dimension_numbers<[1], [0], [0], [1], [0, 0, 1, 1], [], []>} : vector<2x32xf32>, vector<32x96xf32>, vector<2x96xf32> -> vector<2x96xf32>
    %13 = vector.extract_strided_slice %11 {offsets = [0, 0], sizes = [2, 64], strides = [1, 1]} : vector<2x96xf32> to vector<2x64xf32>
    %14 = vector.extract_strided_slice %12 {offsets = [0, 0], sizes = [2, 64], strides = [1, 1]} : vector<2x96xf32> to vector<2x64xf32>
    %15 = arith.addf %13, %14 : vector<2x64xf32>
    %16 = arith.negf %15 : vector<2x64xf32>
    %17 = math.exp %16 : vector<2x64xf32>
    %cst_11 = arith.constant 1.000000e+00 : f32
    %18 = vector.broadcast %cst_11 : f32 to vector<2x64xf32>
    %19 = arith.addf %18, %17 : vector<2x64xf32>
    %20 = arith.divf %18, %19 : vector<2x64xf32>
    %21 = vector.extract_strided_slice %20 {offsets = [0, 0], sizes = [2, 32], strides = [1, 1]} : vector<2x64xf32> to vector<2x32xf32>
    %22 = vector.extract_strided_slice %20 {offsets = [0, 32], sizes = [2, 32], strides = [1, 1]} : vector<2x64xf32> to vector<2x32xf32>
    %23 = vector.extract_strided_slice %11 {offsets = [0, 64], sizes = [2, 32], strides = [1, 1]} : vector<2x96xf32> to vector<2x32xf32>
    %24 = vector.extract_strided_slice %12 {offsets = [0, 64], sizes = [2, 32], strides = [1, 1]} : vector<2x96xf32> to vector<2x32xf32>
    %25 = arith.addf %24, %9 : vector<2x32xf32>
    %26 = arith.mulf %21, %25 : vector<2x32xf32>
    %27 = arith.addf %23, %26 : vector<2x32xf32>
    %28 = math.tanh %27 : vector<2x32xf32>
    %cst_12 = arith.constant 1.000000e+00 : f32
    %29 = vector.broadcast %cst_12 : f32 to vector<2x32xf32>
    %30 = arith.subf %29, %22 : vector<2x32xf32>
    %31 = arith.mulf %30, %28 : vector<2x32xf32>
    %32 = arith.mulf %22, %10 : vector<2x32xf32>
    %33 = arith.addf %31, %32 : vector<2x32xf32>
    %34 = vector.extract_strided_slice %7 {offsets = [2, 0], sizes = [2, 96], strides = [1, 1]} : vector<16x96xf32> to vector<2x96xf32>
    %cst_13 = arith.constant dense<0.000000e+00> : vector<2x96xf32>
    %35 = tpu.matmul %33, %2, %cst_13 {dimension_numbers = #tpu.dot_dimension_numbers<[1], [0], [0], [1], [0, 0, 1, 1], [], []>} : vector<2x32xf32>, vector<32x96xf32>, vector<2x96xf32> -> vector<2x96xf32>
    %36 = vector.extract_strided_slice %34 {offsets = [0, 0], sizes = [2, 64], strides = [1, 1]} : vector<2x96xf32> to vector<2x64xf32>
    %37 = vector.extract_strided_slice %35 {offsets = [0, 0], sizes = [2, 64], strides = [1, 1]} : vector<2x96xf32> to vector<2x64xf32>
    %38 = arith.addf %36, %37 : vector<2x64xf32>
    %39 = arith.negf %38 : vector<2x64xf32>
    %40 = math.exp %39 : vector<2x64xf32>
    %cst_14 = arith.constant 1.000000e+00 : f32
    %41 = vector.broadcast %cst_14 : f32 to vector<2x64xf32>
    %42 = arith.addf %41, %40 : vector<2x64xf32>
    %43 = arith.divf %41, %42 : vector<2x64xf32>
    %44 = vector.extract_strided_slice %43 {offsets = [0, 0], sizes = [2, 32], strides = [1, 1]} : vector<2x64xf32> to vector<2x32xf32>
    %45 = vector.extract_strided_slice %43 {offsets = [0, 32], sizes = [2, 32], strides = [1, 1]} : vector<2x64xf32> to vector<2x32xf32>
    %46 = vector.extract_strided_slice %34 {offsets = [0, 64], sizes = [2, 32], strides = [1, 1]} : vector<2x96xf32> to vector<2x32xf32>
    %47 = vector.extract_strided_slice %35 {offsets = [0, 64], sizes = [2, 32], strides = [1, 1]} : vector<2x96xf32> to vector<2x32xf32>
    %48 = arith.addf %47, %9 : vector<2x32xf32>
    %49 = arith.mulf %44, %48 : vector<2x32xf32>
    %50 = arith.addf %46, %49 : vector<2x32xf32>
    %51 = math.tanh %50 : vector<2x32xf32>
    %cst_15 = arith.constant 1.000000e+00 : f32
    %52 = vector.broadcast %cst_15 : f32 to vector<2x32xf32>
    %53 = arith.subf %52, %45 : vector<2x32xf32>
    %54 = arith.mulf %53, %51 : vector<2x32xf32>
    %55 = arith.mulf %45, %33 : vector<2x32xf32>
    %56 = arith.addf %54, %55 : vector<2x32xf32>
    %57 = vector.extract_strided_slice %7 {offsets = [4, 0], sizes = [2, 96], strides = [1, 1]} : vector<16x96xf32> to vector<2x96xf32>
    %cst_16 = arith.constant dense<0.000000e+00> : vector<2x96xf32>
    %58 = tpu.matmul %56, %2, %cst_16 {dimension_numbers = #tpu.dot_dimension_numbers<[1], [0], [0], [1], [0, 0, 1, 1], [], []>} : vector<2x32xf32>, vector<32x96xf32>, vector<2x96xf32> -> vector<2x96xf32>
    %59 = vector.extract_strided_slice %57 {offsets = [0, 0], sizes = [2, 64], strides = [1, 1]} : vector<2x96xf32> to vector<2x64xf32>
    %60 = vector.extract_strided_slice %58 {offsets = [0, 0], sizes = [2, 64], strides = [1, 1]} : vector<2x96xf32> to vector<2x64xf32>
    %61 = arith.addf %59, %60 : vector<2x64xf32>
    %62 = arith.negf %61 : vector<2x64xf32>
    %63 = math.exp %62 : vector<2x64xf32>
    %cst_17 = arith.constant 1.000000e+00 : f32
    %64 = vector.broadcast %cst_17 : f32 to vector<2x64xf32>
    %65 = arith.addf %64, %63 : vector<2x64xf32>
    %66 = arith.divf %64, %65 : vector<2x64xf32>
    %67 = vector.extract_strided_slice %66 {offsets = [0, 0], sizes = [2, 32], strides = [1, 1]} : vector<2x64xf32> to vector<2x32xf32>
    %68 = vector.extract_strided_slice %66 {offsets = [0, 32], sizes = [2, 32], strides = [1, 1]} : vector<2x64xf32> to vector<2x32xf32>
    %69 = vector.extract_strided_slice %57 {offsets = [0, 64], sizes = [2, 32], strides = [1, 1]} : vector<2x96xf32> to vector<2x32xf32>
    %70 = vector.extract_strided_slice %58 {offsets = [0, 64], sizes = [2, 32], strides = [1, 1]} : vector<2x96xf32> to vector<2x32xf32>
    %71 = arith.addf %70, %9 : vector<2x32xf32>
    %72 = arith.mulf %67, %71 : vector<2x32xf32>
    %73 = arith.addf %69, %72 : vector<2x32xf32>
    %74 = math.tanh %73 : vector<2x32xf32>
    %cst_18 = arith.constant 1.000000e+00 : f32
    %75 = vector.broadcast %cst_18 : f32 to vector<2x32xf32>
    %76 = arith.subf %75, %68 : vector<2x32xf32>
    %77 = arith.mulf %76, %74 : vector<2x32xf32>
    %78 = arith.mulf %68, %56 : vector<2x32xf32>
    %79 = arith.addf %77, %78 : vector<2x32xf32>
    %80 = vector.extract_strided_slice %7 {offsets = [6, 0], sizes = [2, 96], strides = [1, 1]} : vector<16x96xf32> to vector<2x96xf32>
    %cst_19 = arith.constant dense<0.000000e+00> : vector<2x96xf32>
    %81 = tpu.matmul %79, %2, %cst_19 {dimension_numbers = #tpu.dot_dimension_numbers<[1], [0], [0], [1], [0, 0, 1, 1], [], []>} : vector<2x32xf32>, vector<32x96xf32>, vector<2x96xf32> -> vector<2x96xf32>
    %82 = vector.extract_strided_slice %80 {offsets = [0, 0], sizes = [2, 64], strides = [1, 1]} : vector<2x96xf32> to vector<2x64xf32>
    %83 = vector.extract_strided_slice %81 {offsets = [0, 0], sizes = [2, 64], strides = [1, 1]} : vector<2x96xf32> to vector<2x64xf32>
    %84 = arith.addf %82, %83 : vector<2x64xf32>
    %85 = arith.negf %84 : vector<2x64xf32>
    %86 = math.exp %85 : vector<2x64xf32>
    %cst_20 = arith.constant 1.000000e+00 : f32
    %87 = vector.broadcast %cst_20 : f32 to vector<2x64xf32>
    %88 = arith.addf %87, %86 : vector<2x64xf32>
    %89 = arith.divf %87, %88 : vector<2x64xf32>
    %90 = vector.extract_strided_slice %89 {offsets = [0, 0], sizes = [2, 32], strides = [1, 1]} : vector<2x64xf32> to vector<2x32xf32>
    %91 = vector.extract_strided_slice %89 {offsets = [0, 32], sizes = [2, 32], strides = [1, 1]} : vector<2x64xf32> to vector<2x32xf32>
    %92 = vector.extract_strided_slice %80 {offsets = [0, 64], sizes = [2, 32], strides = [1, 1]} : vector<2x96xf32> to vector<2x32xf32>
    %93 = vector.extract_strided_slice %81 {offsets = [0, 64], sizes = [2, 32], strides = [1, 1]} : vector<2x96xf32> to vector<2x32xf32>
    %94 = arith.addf %93, %9 : vector<2x32xf32>
    %95 = arith.mulf %90, %94 : vector<2x32xf32>
    %96 = arith.addf %92, %95 : vector<2x32xf32>
    %97 = math.tanh %96 : vector<2x32xf32>
    %cst_21 = arith.constant 1.000000e+00 : f32
    %98 = vector.broadcast %cst_21 : f32 to vector<2x32xf32>
    %99 = arith.subf %98, %91 : vector<2x32xf32>
    %100 = arith.mulf %99, %97 : vector<2x32xf32>
    %101 = arith.mulf %91, %79 : vector<2x32xf32>
    %102 = arith.addf %100, %101 : vector<2x32xf32>
    %103 = vector.extract_strided_slice %7 {offsets = [8, 0], sizes = [2, 96], strides = [1, 1]} : vector<16x96xf32> to vector<2x96xf32>
    %cst_22 = arith.constant dense<0.000000e+00> : vector<2x96xf32>
    %104 = tpu.matmul %102, %2, %cst_22 {dimension_numbers = #tpu.dot_dimension_numbers<[1], [0], [0], [1], [0, 0, 1, 1], [], []>} : vector<2x32xf32>, vector<32x96xf32>, vector<2x96xf32> -> vector<2x96xf32>
    %105 = vector.extract_strided_slice %103 {offsets = [0, 0], sizes = [2, 64], strides = [1, 1]} : vector<2x96xf32> to vector<2x64xf32>
    %106 = vector.extract_strided_slice %104 {offsets = [0, 0], sizes = [2, 64], strides = [1, 1]} : vector<2x96xf32> to vector<2x64xf32>
    %107 = arith.addf %105, %106 : vector<2x64xf32>
    %108 = arith.negf %107 : vector<2x64xf32>
    %109 = math.exp %108 : vector<2x64xf32>
    %cst_23 = arith.constant 1.000000e+00 : f32
    %110 = vector.broadcast %cst_23 : f32 to vector<2x64xf32>
    %111 = arith.addf %110, %109 : vector<2x64xf32>
    %112 = arith.divf %110, %111 : vector<2x64xf32>
    %113 = vector.extract_strided_slice %112 {offsets = [0, 0], sizes = [2, 32], strides = [1, 1]} : vector<2x64xf32> to vector<2x32xf32>
    %114 = vector.extract_strided_slice %112 {offsets = [0, 32], sizes = [2, 32], strides = [1, 1]} : vector<2x64xf32> to vector<2x32xf32>
    %115 = vector.extract_strided_slice %103 {offsets = [0, 64], sizes = [2, 32], strides = [1, 1]} : vector<2x96xf32> to vector<2x32xf32>
    %116 = vector.extract_strided_slice %104 {offsets = [0, 64], sizes = [2, 32], strides = [1, 1]} : vector<2x96xf32> to vector<2x32xf32>
    %117 = arith.addf %116, %9 : vector<2x32xf32>
    %118 = arith.mulf %113, %117 : vector<2x32xf32>
    %119 = arith.addf %115, %118 : vector<2x32xf32>
    %120 = math.tanh %119 : vector<2x32xf32>
    %cst_24 = arith.constant 1.000000e+00 : f32
    %121 = vector.broadcast %cst_24 : f32 to vector<2x32xf32>
    %122 = arith.subf %121, %114 : vector<2x32xf32>
    %123 = arith.mulf %122, %120 : vector<2x32xf32>
    %124 = arith.mulf %114, %102 : vector<2x32xf32>
    %125 = arith.addf %123, %124 : vector<2x32xf32>
    %126 = vector.extract_strided_slice %7 {offsets = [10, 0], sizes = [2, 96], strides = [1, 1]} : vector<16x96xf32> to vector<2x96xf32>
    %cst_25 = arith.constant dense<0.000000e+00> : vector<2x96xf32>
    %127 = tpu.matmul %125, %2, %cst_25 {dimension_numbers = #tpu.dot_dimension_numbers<[1], [0], [0], [1], [0, 0, 1, 1], [], []>} : vector<2x32xf32>, vector<32x96xf32>, vector<2x96xf32> -> vector<2x96xf32>
    %128 = vector.extract_strided_slice %126 {offsets = [0, 0], sizes = [2, 64], strides = [1, 1]} : vector<2x96xf32> to vector<2x64xf32>
    %129 = vector.extract_strided_slice %127 {offsets = [0, 0], sizes = [2, 64], strides = [1, 1]} : vector<2x96xf32> to vector<2x64xf32>
    %130 = arith.addf %128, %129 : vector<2x64xf32>
    %131 = arith.negf %130 : vector<2x64xf32>
    %132 = math.exp %131 : vector<2x64xf32>
    %cst_26 = arith.constant 1.000000e+00 : f32
    %133 = vector.broadcast %cst_26 : f32 to vector<2x64xf32>
    %134 = arith.addf %133, %132 : vector<2x64xf32>
    %135 = arith.divf %133, %134 : vector<2x64xf32>
    %136 = vector.extract_strided_slice %135 {offsets = [0, 0], sizes = [2, 32], strides = [1, 1]} : vector<2x64xf32> to vector<2x32xf32>
    %137 = vector.extract_strided_slice %135 {offsets = [0, 32], sizes = [2, 32], strides = [1, 1]} : vector<2x64xf32> to vector<2x32xf32>
    %138 = vector.extract_strided_slice %126 {offsets = [0, 64], sizes = [2, 32], strides = [1, 1]} : vector<2x96xf32> to vector<2x32xf32>
    %139 = vector.extract_strided_slice %127 {offsets = [0, 64], sizes = [2, 32], strides = [1, 1]} : vector<2x96xf32> to vector<2x32xf32>
    %140 = arith.addf %139, %9 : vector<2x32xf32>
    %141 = arith.mulf %136, %140 : vector<2x32xf32>
    %142 = arith.addf %138, %141 : vector<2x32xf32>
    %143 = math.tanh %142 : vector<2x32xf32>
    %cst_27 = arith.constant 1.000000e+00 : f32
    %144 = vector.broadcast %cst_27 : f32 to vector<2x32xf32>
    %145 = arith.subf %144, %137 : vector<2x32xf32>
    %146 = arith.mulf %145, %143 : vector<2x32xf32>
    %147 = arith.mulf %137, %125 : vector<2x32xf32>
    %148 = arith.addf %146, %147 : vector<2x32xf32>
    %149 = vector.extract_strided_slice %7 {offsets = [12, 0], sizes = [2, 96], strides = [1, 1]} : vector<16x96xf32> to vector<2x96xf32>
    %cst_28 = arith.constant dense<0.000000e+00> : vector<2x96xf32>
    %150 = tpu.matmul %148, %2, %cst_28 {dimension_numbers = #tpu.dot_dimension_numbers<[1], [0], [0], [1], [0, 0, 1, 1], [], []>} : vector<2x32xf32>, vector<32x96xf32>, vector<2x96xf32> -> vector<2x96xf32>
    %151 = vector.extract_strided_slice %149 {offsets = [0, 0], sizes = [2, 64], strides = [1, 1]} : vector<2x96xf32> to vector<2x64xf32>
    %152 = vector.extract_strided_slice %150 {offsets = [0, 0], sizes = [2, 64], strides = [1, 1]} : vector<2x96xf32> to vector<2x64xf32>
    %153 = arith.addf %151, %152 : vector<2x64xf32>
    %154 = arith.negf %153 : vector<2x64xf32>
    %155 = math.exp %154 : vector<2x64xf32>
    %cst_29 = arith.constant 1.000000e+00 : f32
    %156 = vector.broadcast %cst_29 : f32 to vector<2x64xf32>
    %157 = arith.addf %156, %155 : vector<2x64xf32>
    %158 = arith.divf %156, %157 : vector<2x64xf32>
    %159 = vector.extract_strided_slice %158 {offsets = [0, 0], sizes = [2, 32], strides = [1, 1]} : vector<2x64xf32> to vector<2x32xf32>
    %160 = vector.extract_strided_slice %158 {offsets = [0, 32], sizes = [2, 32], strides = [1, 1]} : vector<2x64xf32> to vector<2x32xf32>
    %161 = vector.extract_strided_slice %149 {offsets = [0, 64], sizes = [2, 32], strides = [1, 1]} : vector<2x96xf32> to vector<2x32xf32>
    %162 = vector.extract_strided_slice %150 {offsets = [0, 64], sizes = [2, 32], strides = [1, 1]} : vector<2x96xf32> to vector<2x32xf32>
    %163 = arith.addf %162, %9 : vector<2x32xf32>
    %164 = arith.mulf %159, %163 : vector<2x32xf32>
    %165 = arith.addf %161, %164 : vector<2x32xf32>
    %166 = math.tanh %165 : vector<2x32xf32>
    %cst_30 = arith.constant 1.000000e+00 : f32
    %167 = vector.broadcast %cst_30 : f32 to vector<2x32xf32>
    %168 = arith.subf %167, %160 : vector<2x32xf32>
    %169 = arith.mulf %168, %166 : vector<2x32xf32>
    %170 = arith.mulf %160, %148 : vector<2x32xf32>
    %171 = arith.addf %169, %170 : vector<2x32xf32>
    %172 = vector.extract_strided_slice %7 {offsets = [14, 0], sizes = [2, 96], strides = [1, 1]} : vector<16x96xf32> to vector<2x96xf32>
    %cst_31 = arith.constant dense<0.000000e+00> : vector<2x96xf32>
    %173 = tpu.matmul %171, %2, %cst_31 {dimension_numbers = #tpu.dot_dimension_numbers<[1], [0], [0], [1], [0, 0, 1, 1], [], []>} : vector<2x32xf32>, vector<32x96xf32>, vector<2x96xf32> -> vector<2x96xf32>
    %174 = vector.extract_strided_slice %172 {offsets = [0, 0], sizes = [2, 64], strides = [1, 1]} : vector<2x96xf32> to vector<2x64xf32>
    %175 = vector.extract_strided_slice %173 {offsets = [0, 0], sizes = [2, 64], strides = [1, 1]} : vector<2x96xf32> to vector<2x64xf32>
    %176 = arith.addf %174, %175 : vector<2x64xf32>
    %177 = arith.negf %176 : vector<2x64xf32>
    %178 = math.exp %177 : vector<2x64xf32>
    %cst_32 = arith.constant 1.000000e+00 : f32
    %179 = vector.broadcast %cst_32 : f32 to vector<2x64xf32>
    %180 = arith.addf %179, %178 : vector<2x64xf32>
    %181 = arith.divf %179, %180 : vector<2x64xf32>
    %182 = vector.extract_strided_slice %181 {offsets = [0, 0], sizes = [2, 32], strides = [1, 1]} : vector<2x64xf32> to vector<2x32xf32>
    %183 = vector.extract_strided_slice %181 {offsets = [0, 32], sizes = [2, 32], strides = [1, 1]} : vector<2x64xf32> to vector<2x32xf32>
    %184 = vector.extract_strided_slice %172 {offsets = [0, 64], sizes = [2, 32], strides = [1, 1]} : vector<2x96xf32> to vector<2x32xf32>
    %185 = vector.extract_strided_slice %173 {offsets = [0, 64], sizes = [2, 32], strides = [1, 1]} : vector<2x96xf32> to vector<2x32xf32>
    %186 = arith.addf %185, %9 : vector<2x32xf32>
    %187 = arith.mulf %182, %186 : vector<2x32xf32>
    %188 = arith.addf %184, %187 : vector<2x32xf32>
    %189 = math.tanh %188 : vector<2x32xf32>
    %cst_33 = arith.constant 1.000000e+00 : f32
    %190 = vector.broadcast %cst_33 : f32 to vector<2x32xf32>
    %191 = arith.subf %190, %183 : vector<2x32xf32>
    %192 = arith.mulf %191, %189 : vector<2x32xf32>
    %193 = arith.mulf %183, %171 : vector<2x32xf32>
    %194 = arith.addf %192, %193 : vector<2x32xf32>
    %195 = tpu.concatenate %33, %56, %79, %102, %125, %148, %171, %194 in 0 : vector<2x32xf32>, vector<2x32xf32>, vector<2x32xf32>, vector<2x32xf32>, vector<2x32xf32>, vector<2x32xf32>, vector<2x32xf32>, vector<2x32xf32> -> vector<16x32xf32>
    %c0_34 = arith.constant 0 : index
    %c0_35 = arith.constant 0 : index
    %196 = vector.load %arg5[%c0_34, %c0_35] : memref<32x96xf32, #tpu.memory_space<vmem>>, vector<32x96xf32>
    %c0_36 = arith.constant 0 : index
    %c0_37 = arith.constant 0 : index
    %197 = vector.load %arg6[%c0_36, %c0_37] : memref<32x96xf32, #tpu.memory_space<vmem>>, vector<32x96xf32>
    %c0_38 = arith.constant 0 : index
    %c0_39 = arith.constant 0 : index
    %198 = vector.load %arg7[%c0_38, %c0_39] : memref<1x96xf32, #tpu.memory_space<vmem>>, vector<1x96xf32>
    %c0_40 = arith.constant 0 : index
    %c0_41 = arith.constant 0 : index
    %199 = vector.load %arg8[%c0_40, %c0_41] : memref<1x32xf32, #tpu.memory_space<vmem>>, vector<1x32xf32>
    %cst_42 = arith.constant dense<0.000000e+00> : vector<16x96xf32>
    %200 = tpu.matmul %195, %196, %cst_42 {dimension_numbers = #tpu.dot_dimension_numbers<[1], [0], [0], [1], [0, 0, 1, 1], [], []>} : vector<16x32xf32>, vector<32x96xf32>, vector<16x96xf32> -> vector<16x96xf32>
    %201 = vector.broadcast %198 : vector<1x96xf32> to vector<16x96xf32>
    %202 = arith.addf %200, %201 : vector<16x96xf32>
    %203 = vector.shape_cast %199 : vector<1x32xf32> to vector<1x32xf32>
    %204 = vector.broadcast %203 : vector<1x32xf32> to vector<2x32xf32>
    %cst_43 = arith.constant 0.000000e+00 : f32
    %205 = vector.broadcast %cst_43 : f32 to vector<2x32xf32>
    %206 = vector.extract_strided_slice %202 {offsets = [0, 0], sizes = [2, 96], strides = [1, 1]} : vector<16x96xf32> to vector<2x96xf32>
    %cst_44 = arith.constant dense<0.000000e+00> : vector<2x96xf32>
    %207 = tpu.matmul %205, %197, %cst_44 {dimension_numbers = #tpu.dot_dimension_numbers<[1], [0], [0], [1], [0, 0, 1, 1], [], []>} : vector<2x32xf32>, vector<32x96xf32>, vector<2x96xf32> -> vector<2x96xf32>
    %208 = vector.extract_strided_slice %206 {offsets = [0, 0], sizes = [2, 64], strides = [1, 1]} : vector<2x96xf32> to vector<2x64xf32>
    %209 = vector.extract_strided_slice %207 {offsets = [0, 0], sizes = [2, 64], strides = [1, 1]} : vector<2x96xf32> to vector<2x64xf32>
    %210 = arith.addf %208, %209 : vector<2x64xf32>
    %211 = arith.negf %210 : vector<2x64xf32>
    %212 = math.exp %211 : vector<2x64xf32>
    %cst_45 = arith.constant 1.000000e+00 : f32
    %213 = vector.broadcast %cst_45 : f32 to vector<2x64xf32>
    %214 = arith.addf %213, %212 : vector<2x64xf32>
    %215 = arith.divf %213, %214 : vector<2x64xf32>
    %216 = vector.extract_strided_slice %215 {offsets = [0, 0], sizes = [2, 32], strides = [1, 1]} : vector<2x64xf32> to vector<2x32xf32>
    %217 = vector.extract_strided_slice %215 {offsets = [0, 32], sizes = [2, 32], strides = [1, 1]} : vector<2x64xf32> to vector<2x32xf32>
    %218 = vector.extract_strided_slice %206 {offsets = [0, 64], sizes = [2, 32], strides = [1, 1]} : vector<2x96xf32> to vector<2x32xf32>
    %219 = vector.extract_strided_slice %207 {offsets = [0, 64], sizes = [2, 32], strides = [1, 1]} : vector<2x96xf32> to vector<2x32xf32>
    %220 = arith.addf %219, %204 : vector<2x32xf32>
    %221 = arith.mulf %216, %220 : vector<2x32xf32>
    %222 = arith.addf %218, %221 : vector<2x32xf32>
    %223 = math.tanh %222 : vector<2x32xf32>
    %cst_46 = arith.constant 1.000000e+00 : f32
    %224 = vector.broadcast %cst_46 : f32 to vector<2x32xf32>
    %225 = arith.subf %224, %217 : vector<2x32xf32>
    %226 = arith.mulf %225, %223 : vector<2x32xf32>
    %227 = arith.mulf %217, %205 : vector<2x32xf32>
    %228 = arith.addf %226, %227 : vector<2x32xf32>
    %229 = vector.extract_strided_slice %202 {offsets = [2, 0], sizes = [2, 96], strides = [1, 1]} : vector<16x96xf32> to vector<2x96xf32>
    %cst_47 = arith.constant dense<0.000000e+00> : vector<2x96xf32>
    %230 = tpu.matmul %228, %197, %cst_47 {dimension_numbers = #tpu.dot_dimension_numbers<[1], [0], [0], [1], [0, 0, 1, 1], [], []>} : vector<2x32xf32>, vector<32x96xf32>, vector<2x96xf32> -> vector<2x96xf32>
    %231 = vector.extract_strided_slice %229 {offsets = [0, 0], sizes = [2, 64], strides = [1, 1]} : vector<2x96xf32> to vector<2x64xf32>
    %232 = vector.extract_strided_slice %230 {offsets = [0, 0], sizes = [2, 64], strides = [1, 1]} : vector<2x96xf32> to vector<2x64xf32>
    %233 = arith.addf %231, %232 : vector<2x64xf32>
    %234 = arith.negf %233 : vector<2x64xf32>
    %235 = math.exp %234 : vector<2x64xf32>
    %cst_48 = arith.constant 1.000000e+00 : f32
    %236 = vector.broadcast %cst_48 : f32 to vector<2x64xf32>
    %237 = arith.addf %236, %235 : vector<2x64xf32>
    %238 = arith.divf %236, %237 : vector<2x64xf32>
    %239 = vector.extract_strided_slice %238 {offsets = [0, 0], sizes = [2, 32], strides = [1, 1]} : vector<2x64xf32> to vector<2x32xf32>
    %240 = vector.extract_strided_slice %238 {offsets = [0, 32], sizes = [2, 32], strides = [1, 1]} : vector<2x64xf32> to vector<2x32xf32>
    %241 = vector.extract_strided_slice %229 {offsets = [0, 64], sizes = [2, 32], strides = [1, 1]} : vector<2x96xf32> to vector<2x32xf32>
    %242 = vector.extract_strided_slice %230 {offsets = [0, 64], sizes = [2, 32], strides = [1, 1]} : vector<2x96xf32> to vector<2x32xf32>
    %243 = arith.addf %242, %204 : vector<2x32xf32>
    %244 = arith.mulf %239, %243 : vector<2x32xf32>
    %245 = arith.addf %241, %244 : vector<2x32xf32>
    %246 = math.tanh %245 : vector<2x32xf32>
    %cst_49 = arith.constant 1.000000e+00 : f32
    %247 = vector.broadcast %cst_49 : f32 to vector<2x32xf32>
    %248 = arith.subf %247, %240 : vector<2x32xf32>
    %249 = arith.mulf %248, %246 : vector<2x32xf32>
    %250 = arith.mulf %240, %228 : vector<2x32xf32>
    %251 = arith.addf %249, %250 : vector<2x32xf32>
    %252 = vector.extract_strided_slice %202 {offsets = [4, 0], sizes = [2, 96], strides = [1, 1]} : vector<16x96xf32> to vector<2x96xf32>
    %cst_50 = arith.constant dense<0.000000e+00> : vector<2x96xf32>
    %253 = tpu.matmul %251, %197, %cst_50 {dimension_numbers = #tpu.dot_dimension_numbers<[1], [0], [0], [1], [0, 0, 1, 1], [], []>} : vector<2x32xf32>, vector<32x96xf32>, vector<2x96xf32> -> vector<2x96xf32>
    %254 = vector.extract_strided_slice %252 {offsets = [0, 0], sizes = [2, 64], strides = [1, 1]} : vector<2x96xf32> to vector<2x64xf32>
    %255 = vector.extract_strided_slice %253 {offsets = [0, 0], sizes = [2, 64], strides = [1, 1]} : vector<2x96xf32> to vector<2x64xf32>
    %256 = arith.addf %254, %255 : vector<2x64xf32>
    %257 = arith.negf %256 : vector<2x64xf32>
    %258 = math.exp %257 : vector<2x64xf32>
    %cst_51 = arith.constant 1.000000e+00 : f32
    %259 = vector.broadcast %cst_51 : f32 to vector<2x64xf32>
    %260 = arith.addf %259, %258 : vector<2x64xf32>
    %261 = arith.divf %259, %260 : vector<2x64xf32>
    %262 = vector.extract_strided_slice %261 {offsets = [0, 0], sizes = [2, 32], strides = [1, 1]} : vector<2x64xf32> to vector<2x32xf32>
    %263 = vector.extract_strided_slice %261 {offsets = [0, 32], sizes = [2, 32], strides = [1, 1]} : vector<2x64xf32> to vector<2x32xf32>
    %264 = vector.extract_strided_slice %252 {offsets = [0, 64], sizes = [2, 32], strides = [1, 1]} : vector<2x96xf32> to vector<2x32xf32>
    %265 = vector.extract_strided_slice %253 {offsets = [0, 64], sizes = [2, 32], strides = [1, 1]} : vector<2x96xf32> to vector<2x32xf32>
    %266 = arith.addf %265, %204 : vector<2x32xf32>
    %267 = arith.mulf %262, %266 : vector<2x32xf32>
    %268 = arith.addf %264, %267 : vector<2x32xf32>
    %269 = math.tanh %268 : vector<2x32xf32>
    %cst_52 = arith.constant 1.000000e+00 : f32
    %270 = vector.broadcast %cst_52 : f32 to vector<2x32xf32>
    %271 = arith.subf %270, %263 : vector<2x32xf32>
    %272 = arith.mulf %271, %269 : vector<2x32xf32>
    %273 = arith.mulf %263, %251 : vector<2x32xf32>
    %274 = arith.addf %272, %273 : vector<2x32xf32>
    %275 = vector.extract_strided_slice %202 {offsets = [6, 0], sizes = [2, 96], strides = [1, 1]} : vector<16x96xf32> to vector<2x96xf32>
    %cst_53 = arith.constant dense<0.000000e+00> : vector<2x96xf32>
    %276 = tpu.matmul %274, %197, %cst_53 {dimension_numbers = #tpu.dot_dimension_numbers<[1], [0], [0], [1], [0, 0, 1, 1], [], []>} : vector<2x32xf32>, vector<32x96xf32>, vector<2x96xf32> -> vector<2x96xf32>
    %277 = vector.extract_strided_slice %275 {offsets = [0, 0], sizes = [2, 64], strides = [1, 1]} : vector<2x96xf32> to vector<2x64xf32>
    %278 = vector.extract_strided_slice %276 {offsets = [0, 0], sizes = [2, 64], strides = [1, 1]} : vector<2x96xf32> to vector<2x64xf32>
    %279 = arith.addf %277, %278 : vector<2x64xf32>
    %280 = arith.negf %279 : vector<2x64xf32>
    %281 = math.exp %280 : vector<2x64xf32>
    %cst_54 = arith.constant 1.000000e+00 : f32
    %282 = vector.broadcast %cst_54 : f32 to vector<2x64xf32>
    %283 = arith.addf %282, %281 : vector<2x64xf32>
    %284 = arith.divf %282, %283 : vector<2x64xf32>
    %285 = vector.extract_strided_slice %284 {offsets = [0, 0], sizes = [2, 32], strides = [1, 1]} : vector<2x64xf32> to vector<2x32xf32>
    %286 = vector.extract_strided_slice %284 {offsets = [0, 32], sizes = [2, 32], strides = [1, 1]} : vector<2x64xf32> to vector<2x32xf32>
    %287 = vector.extract_strided_slice %275 {offsets = [0, 64], sizes = [2, 32], strides = [1, 1]} : vector<2x96xf32> to vector<2x32xf32>
    %288 = vector.extract_strided_slice %276 {offsets = [0, 64], sizes = [2, 32], strides = [1, 1]} : vector<2x96xf32> to vector<2x32xf32>
    %289 = arith.addf %288, %204 : vector<2x32xf32>
    %290 = arith.mulf %285, %289 : vector<2x32xf32>
    %291 = arith.addf %287, %290 : vector<2x32xf32>
    %292 = math.tanh %291 : vector<2x32xf32>
    %cst_55 = arith.constant 1.000000e+00 : f32
    %293 = vector.broadcast %cst_55 : f32 to vector<2x32xf32>
    %294 = arith.subf %293, %286 : vector<2x32xf32>
    %295 = arith.mulf %294, %292 : vector<2x32xf32>
    %296 = arith.mulf %286, %274 : vector<2x32xf32>
    %297 = arith.addf %295, %296 : vector<2x32xf32>
    %298 = vector.extract_strided_slice %202 {offsets = [8, 0], sizes = [2, 96], strides = [1, 1]} : vector<16x96xf32> to vector<2x96xf32>
    %cst_56 = arith.constant dense<0.000000e+00> : vector<2x96xf32>
    %299 = tpu.matmul %297, %197, %cst_56 {dimension_numbers = #tpu.dot_dimension_numbers<[1], [0], [0], [1], [0, 0, 1, 1], [], []>} : vector<2x32xf32>, vector<32x96xf32>, vector<2x96xf32> -> vector<2x96xf32>
    %300 = vector.extract_strided_slice %298 {offsets = [0, 0], sizes = [2, 64], strides = [1, 1]} : vector<2x96xf32> to vector<2x64xf32>
    %301 = vector.extract_strided_slice %299 {offsets = [0, 0], sizes = [2, 64], strides = [1, 1]} : vector<2x96xf32> to vector<2x64xf32>
    %302 = arith.addf %300, %301 : vector<2x64xf32>
    %303 = arith.negf %302 : vector<2x64xf32>
    %304 = math.exp %303 : vector<2x64xf32>
    %cst_57 = arith.constant 1.000000e+00 : f32
    %305 = vector.broadcast %cst_57 : f32 to vector<2x64xf32>
    %306 = arith.addf %305, %304 : vector<2x64xf32>
    %307 = arith.divf %305, %306 : vector<2x64xf32>
    %308 = vector.extract_strided_slice %307 {offsets = [0, 0], sizes = [2, 32], strides = [1, 1]} : vector<2x64xf32> to vector<2x32xf32>
    %309 = vector.extract_strided_slice %307 {offsets = [0, 32], sizes = [2, 32], strides = [1, 1]} : vector<2x64xf32> to vector<2x32xf32>
    %310 = vector.extract_strided_slice %298 {offsets = [0, 64], sizes = [2, 32], strides = [1, 1]} : vector<2x96xf32> to vector<2x32xf32>
    %311 = vector.extract_strided_slice %299 {offsets = [0, 64], sizes = [2, 32], strides = [1, 1]} : vector<2x96xf32> to vector<2x32xf32>
    %312 = arith.addf %311, %204 : vector<2x32xf32>
    %313 = arith.mulf %308, %312 : vector<2x32xf32>
    %314 = arith.addf %310, %313 : vector<2x32xf32>
    %315 = math.tanh %314 : vector<2x32xf32>
    %cst_58 = arith.constant 1.000000e+00 : f32
    %316 = vector.broadcast %cst_58 : f32 to vector<2x32xf32>
    %317 = arith.subf %316, %309 : vector<2x32xf32>
    %318 = arith.mulf %317, %315 : vector<2x32xf32>
    %319 = arith.mulf %309, %297 : vector<2x32xf32>
    %320 = arith.addf %318, %319 : vector<2x32xf32>
    %321 = vector.extract_strided_slice %202 {offsets = [10, 0], sizes = [2, 96], strides = [1, 1]} : vector<16x96xf32> to vector<2x96xf32>
    %cst_59 = arith.constant dense<0.000000e+00> : vector<2x96xf32>
    %322 = tpu.matmul %320, %197, %cst_59 {dimension_numbers = #tpu.dot_dimension_numbers<[1], [0], [0], [1], [0, 0, 1, 1], [], []>} : vector<2x32xf32>, vector<32x96xf32>, vector<2x96xf32> -> vector<2x96xf32>
    %323 = vector.extract_strided_slice %321 {offsets = [0, 0], sizes = [2, 64], strides = [1, 1]} : vector<2x96xf32> to vector<2x64xf32>
    %324 = vector.extract_strided_slice %322 {offsets = [0, 0], sizes = [2, 64], strides = [1, 1]} : vector<2x96xf32> to vector<2x64xf32>
    %325 = arith.addf %323, %324 : vector<2x64xf32>
    %326 = arith.negf %325 : vector<2x64xf32>
    %327 = math.exp %326 : vector<2x64xf32>
    %cst_60 = arith.constant 1.000000e+00 : f32
    %328 = vector.broadcast %cst_60 : f32 to vector<2x64xf32>
    %329 = arith.addf %328, %327 : vector<2x64xf32>
    %330 = arith.divf %328, %329 : vector<2x64xf32>
    %331 = vector.extract_strided_slice %330 {offsets = [0, 0], sizes = [2, 32], strides = [1, 1]} : vector<2x64xf32> to vector<2x32xf32>
    %332 = vector.extract_strided_slice %330 {offsets = [0, 32], sizes = [2, 32], strides = [1, 1]} : vector<2x64xf32> to vector<2x32xf32>
    %333 = vector.extract_strided_slice %321 {offsets = [0, 64], sizes = [2, 32], strides = [1, 1]} : vector<2x96xf32> to vector<2x32xf32>
    %334 = vector.extract_strided_slice %322 {offsets = [0, 64], sizes = [2, 32], strides = [1, 1]} : vector<2x96xf32> to vector<2x32xf32>
    %335 = arith.addf %334, %204 : vector<2x32xf32>
    %336 = arith.mulf %331, %335 : vector<2x32xf32>
    %337 = arith.addf %333, %336 : vector<2x32xf32>
    %338 = math.tanh %337 : vector<2x32xf32>
    %cst_61 = arith.constant 1.000000e+00 : f32
    %339 = vector.broadcast %cst_61 : f32 to vector<2x32xf32>
    %340 = arith.subf %339, %332 : vector<2x32xf32>
    %341 = arith.mulf %340, %338 : vector<2x32xf32>
    %342 = arith.mulf %332, %320 : vector<2x32xf32>
    %343 = arith.addf %341, %342 : vector<2x32xf32>
    %344 = vector.extract_strided_slice %202 {offsets = [12, 0], sizes = [2, 96], strides = [1, 1]} : vector<16x96xf32> to vector<2x96xf32>
    %cst_62 = arith.constant dense<0.000000e+00> : vector<2x96xf32>
    %345 = tpu.matmul %343, %197, %cst_62 {dimension_numbers = #tpu.dot_dimension_numbers<[1], [0], [0], [1], [0, 0, 1, 1], [], []>} : vector<2x32xf32>, vector<32x96xf32>, vector<2x96xf32> -> vector<2x96xf32>
    %346 = vector.extract_strided_slice %344 {offsets = [0, 0], sizes = [2, 64], strides = [1, 1]} : vector<2x96xf32> to vector<2x64xf32>
    %347 = vector.extract_strided_slice %345 {offsets = [0, 0], sizes = [2, 64], strides = [1, 1]} : vector<2x96xf32> to vector<2x64xf32>
    %348 = arith.addf %346, %347 : vector<2x64xf32>
    %349 = arith.negf %348 : vector<2x64xf32>
    %350 = math.exp %349 : vector<2x64xf32>
    %cst_63 = arith.constant 1.000000e+00 : f32
    %351 = vector.broadcast %cst_63 : f32 to vector<2x64xf32>
    %352 = arith.addf %351, %350 : vector<2x64xf32>
    %353 = arith.divf %351, %352 : vector<2x64xf32>
    %354 = vector.extract_strided_slice %353 {offsets = [0, 0], sizes = [2, 32], strides = [1, 1]} : vector<2x64xf32> to vector<2x32xf32>
    %355 = vector.extract_strided_slice %353 {offsets = [0, 32], sizes = [2, 32], strides = [1, 1]} : vector<2x64xf32> to vector<2x32xf32>
    %356 = vector.extract_strided_slice %344 {offsets = [0, 64], sizes = [2, 32], strides = [1, 1]} : vector<2x96xf32> to vector<2x32xf32>
    %357 = vector.extract_strided_slice %345 {offsets = [0, 64], sizes = [2, 32], strides = [1, 1]} : vector<2x96xf32> to vector<2x32xf32>
    %358 = arith.addf %357, %204 : vector<2x32xf32>
    %359 = arith.mulf %354, %358 : vector<2x32xf32>
    %360 = arith.addf %356, %359 : vector<2x32xf32>
    %361 = math.tanh %360 : vector<2x32xf32>
    %cst_64 = arith.constant 1.000000e+00 : f32
    %362 = vector.broadcast %cst_64 : f32 to vector<2x32xf32>
    %363 = arith.subf %362, %355 : vector<2x32xf32>
    %364 = arith.mulf %363, %361 : vector<2x32xf32>
    %365 = arith.mulf %355, %343 : vector<2x32xf32>
    %366 = arith.addf %364, %365 : vector<2x32xf32>
    %367 = vector.extract_strided_slice %202 {offsets = [14, 0], sizes = [2, 96], strides = [1, 1]} : vector<16x96xf32> to vector<2x96xf32>
    %cst_65 = arith.constant dense<0.000000e+00> : vector<2x96xf32>
    %368 = tpu.matmul %366, %197, %cst_65 {dimension_numbers = #tpu.dot_dimension_numbers<[1], [0], [0], [1], [0, 0, 1, 1], [], []>} : vector<2x32xf32>, vector<32x96xf32>, vector<2x96xf32> -> vector<2x96xf32>
    %369 = vector.extract_strided_slice %367 {offsets = [0, 0], sizes = [2, 64], strides = [1, 1]} : vector<2x96xf32> to vector<2x64xf32>
    %370 = vector.extract_strided_slice %368 {offsets = [0, 0], sizes = [2, 64], strides = [1, 1]} : vector<2x96xf32> to vector<2x64xf32>
    %371 = arith.addf %369, %370 : vector<2x64xf32>
    %372 = arith.negf %371 : vector<2x64xf32>
    %373 = math.exp %372 : vector<2x64xf32>
    %cst_66 = arith.constant 1.000000e+00 : f32
    %374 = vector.broadcast %cst_66 : f32 to vector<2x64xf32>
    %375 = arith.addf %374, %373 : vector<2x64xf32>
    %376 = arith.divf %374, %375 : vector<2x64xf32>
    %377 = vector.extract_strided_slice %376 {offsets = [0, 0], sizes = [2, 32], strides = [1, 1]} : vector<2x64xf32> to vector<2x32xf32>
    %378 = vector.extract_strided_slice %376 {offsets = [0, 32], sizes = [2, 32], strides = [1, 1]} : vector<2x64xf32> to vector<2x32xf32>
    %379 = vector.extract_strided_slice %367 {offsets = [0, 64], sizes = [2, 32], strides = [1, 1]} : vector<2x96xf32> to vector<2x32xf32>
    %380 = vector.extract_strided_slice %368 {offsets = [0, 64], sizes = [2, 32], strides = [1, 1]} : vector<2x96xf32> to vector<2x32xf32>
    %381 = arith.addf %380, %204 : vector<2x32xf32>
    %382 = arith.mulf %377, %381 : vector<2x32xf32>
    %383 = arith.addf %379, %382 : vector<2x32xf32>
    %384 = math.tanh %383 : vector<2x32xf32>
    %cst_67 = arith.constant 1.000000e+00 : f32
    %385 = vector.broadcast %cst_67 : f32 to vector<2x32xf32>
    %386 = arith.subf %385, %378 : vector<2x32xf32>
    %387 = arith.mulf %386, %384 : vector<2x32xf32>
    %388 = arith.mulf %378, %366 : vector<2x32xf32>
    %389 = arith.addf %387, %388 : vector<2x32xf32>
    %390 = tpu.concatenate %228, %251, %274, %297, %320, %343, %366, %389 in 0 : vector<2x32xf32>, vector<2x32xf32>, vector<2x32xf32>, vector<2x32xf32>, vector<2x32xf32>, vector<2x32xf32>, vector<2x32xf32>, vector<2x32xf32> -> vector<16x32xf32>
    %c0_68 = arith.constant 0 : index
    %c0_69 = arith.constant 0 : index
    %391 = vector.load %arg9[%c0_68, %c0_69] : memref<32x4xf32, #tpu.memory_space<vmem>>, vector<32x4xf32>
    %cst_70 = arith.constant dense<0.000000e+00> : vector<16x4xf32>
    %392 = tpu.matmul %390, %391, %cst_70 {dimension_numbers = #tpu.dot_dimension_numbers<[1], [0], [0], [1], [0, 0, 1, 1], [], []>} : vector<16x32xf32>, vector<32x4xf32>, vector<16x4xf32> -> vector<16x4xf32>
    %c0_71 = arith.constant 0 : index
    %c0_72 = arith.constant 0 : index
    %393 = vector.load %arg10[%c0_71, %c0_72] : memref<1x4xf32, #tpu.memory_space<vmem>>, vector<1x4xf32>
    %394 = vector.broadcast %393 : vector<1x4xf32> to vector<16x4xf32>
    %395 = arith.addf %392, %394 : vector<16x4xf32>
    %396 = arith.negf %395 : vector<16x4xf32>
    %397 = math.exp %396 : vector<16x4xf32>
    %cst_73 = arith.constant 1.000000e+00 : f32
    %398 = vector.broadcast %cst_73 : f32 to vector<16x4xf32>
    %399 = arith.addf %398, %397 : vector<16x4xf32>
    %400 = arith.divf %398, %399 : vector<16x4xf32>
    %c0_74 = arith.constant 0 : index
    %c0_75 = arith.constant 0 : index
    %401 = vector.load %arg11[%c0_74, %c0_75] : memref<16x4xf32, #tpu.memory_space<vmem>>, vector<16x4xf32>
    tpu.vector_store %arg11[%c0_74, %c0_75], %400 {strides = array<i32>} : memref<16x4xf32, #tpu.memory_space<vmem>>, vector<16x4xf32>,
    return
  }
}

</mosaic_0001>

<llo_original>
// kernel: gru_net_forward.1
$region0: #{gru_net_forward.1}
  #allocation0 [shape = 'u32[]', space=smem, size = 0x4, offset = 0x4, fixed_abs, tag = 'smem constant byte address 0x4 - core index']
  #allocation1 [shape = 'u32[144,128]{1,0:T(1,128)}', space=vmem, size = 0x12000, scoped, tag = 'internal scratch']
  %s0 = inlined_call_operand.vmem [shape: f32[16,16], index: 0, kind: input, shape index: {}]
  %s1 = inlined_call_operand.hbm [shape: f32[16,96], index: 1, kind: input, shape index: {}]
  %s2 = inlined_call_operand.vmem [shape: f32[32,96], index: 2, kind: input, shape index: {}]
  %s3 = inlined_call_operand.vmem [shape: f32[1,96], index: 3, kind: input, shape index: {}]
  %s4 = inlined_call_operand.vmem [shape: f32[1,32], index: 4, kind: input, shape index: {}]
  %s5 = inlined_call_operand.vmem [shape: f32[32,96], index: 5, kind: input, shape index: {}]
  %s6 = inlined_call_operand.vmem [shape: f32[32,96], index: 6, kind: input, shape index: {}]
  %s7 = inlined_call_operand.vmem [shape: f32[1,96], index: 7, kind: input, shape index: {}]
  %s8 = inlined_call_operand.vmem [shape: f32[1,32], index: 8, kind: input, shape index: {}]
  %s9 = inlined_call_operand.vmem [shape: f32[32,4], index: 9, kind: input, shape index: {}]
  %s10 = inlined_call_operand.vmem [shape: f32[1,4], index: 10, kind: input, shape index: {}]
  %s11 = inlined_call_operand.vmem [shape: f32[16,4], index: 11, kind: output, shape index: {}]
  %s12 = sld [smem:[#allocation0]]
  $region58: #{gru_net_forward.1} parent=0
    _
  %s14 = ssub.s32 1, %s12
  %s15 = scalar_select 0, %s14, %s12
  $region1: #{gru_net_forward.1} parent=0
    #allocation2 [shape = 'u8[8192]{0}', space=vmem, size = 0x2000, scoped, tag = 'input window, operand 1, single buffered']
    #allocation3 [shape = 's32[1]{0}', space=sflag, size = 0x4, scoped, tag = 'scoped memory for gru_net_forward.1']
    %16 = vsyncpa [#allocation3], 0
    // Predicated region
    $region2: #{gru_net_forward.1} parent=1 // pred_check
      _
    $region3: #{gru_net_forward.1} parent=1 // pred_check_branch
      %18 = sbr.rel (0) target = $region5
    $region4: #{gru_net_forward.1} parent=1 // pred_region
      _
    $region5: #{gru_net_forward.1} parent=1 // pred_fallthru
      _
    // Predicated region
    $region6: #{gru_net_forward.1} parent=1 // pred_check
      _
    $region7: #{gru_net_forward.1} parent=1 // pred_check_branch
      %20 = sbr.rel (0) target = $region9
    $region8: #{gru_net_forward.1} parent=1 // pred_region
      %s22 = ssub.s32 256, 256
      %23 = vsyncadd [#allocation3], %s22
      %s24 = sshll.u32 [#allocation2], 4
      %s25 = int_to_ptr.vmem [resolvable:$true] %s24
      %30 = dma.hbm_to_vmem [thread:$0]  %s1, 256, %s25, [#allocation3], 128, 128, 8
    $region9: #{gru_net_forward.1} parent=1 // pred_fallthru
      _
    // Predicated region
    $region10: #{gru_net_forward.1} parent=1 // pred_check
      _
    $region11: #{gru_net_forward.1} parent=1 // pred_check_branch
      %32 = sbr.rel (0) target = $region13
    $region12: #{gru_net_forward.1} parent=1 // pred_region
      _
    $region13: #{gru_net_forward.1} parent=1 // pred_fallthru
      _
    // Predicated region
    $region14: #{gru_net_forward.1} parent=1 // pred_check
      _
    $region15: #{gru_net_forward.1} parent=1 // pred_check_branch
      %34 = sbr.rel (0) target = $region17
    $region16: #{gru_net_forward.1} parent=1 // pred_region
      _
    $region17: #{gru_net_forward.1} parent=1 // pred_fallthru
      _
    // Predicated region
    $region18: #{gru_net_forward.1} parent=1 // pred_check
      _
    $region19: #{gru_net_forward.1} parent=1 // pred_check_branch
      %36 = sbr.rel (0) target = $region21
    $region20: #{gru_net_forward.1} parent=1 // pred_region
      _
    $region21: #{gru_net_forward.1} parent=1 // pred_fallthru
      _
    // Predicated region
    $region22: #{gru_net_forward.1} parent=1 // pred_check
      _
    $region23: #{gru_net_forward.1} parent=1 // pred_check_branch
      %38 = sbr.rel (0) target = $region25
    $region24: #{gru_net_forward.1} parent=1 // pred_region
      _
    $region25: #{gru_net_forward.1} parent=1 // pred_fallthru
      _
    // Predicated region
    $region26: #{gru_net_forward.1} parent=1 // pred_check
      _
    $region27: #{gru_net_forward.1} parent=1 // pred_check_branch
      %40 = sbr.rel (0) target = $region29
    $region28: #{gru_net_forward.1} parent=1 // pred_region
      _
    $region29: #{gru_net_forward.1} parent=1 // pred_fallthru
      _
    // Predicated region
    $region30: #{gru_net_forward.1} parent=1 // pred_check
      _
    $region31: #{gru_net_forward.1} parent=1 // pred_check_branch
      %42 = sbr.rel (0) target = $region33
    $region32: #{gru_net_forward.1} parent=1 // pred_region
      _
    $region33: #{gru_net_forward.1} parent=1 // pred_fallthru
      _
    // Predicated region
    $region34: #{gru_net_forward.1} parent=1 // pred_check
      _
    $region35: #{gru_net_forward.1} parent=1 // pred_check_branch
      %44 = sbr.rel (0) target = $region37
    $region36: #{gru_net_forward.1} parent=1 // pred_region
      _
    $region37: #{gru_net_forward.1} parent=1 // pred_fallthru
      _
    // Predicated region
    $region38: #{gru_net_forward.1} parent=1 // pred_check
      _
    $region39: #{gru_net_forward.1} parent=1 // pred_check_branch
      %46 = sbr.rel (0) target = $region41
    $region40: #{gru_net_forward.1} parent=1 // pred_region
      _
    $region41: #{gru_net_forward.1} parent=1 // pred_fallthru
      _
    // Predicated region
    $region42: #{gru_net_forward.1} parent=1 // pred_check
      _
    $region43: #{gru_net_forward.1} parent=1 // pred_check_branch
      %48 = sbr.rel (0) target = $region45
    $region44: #{gru_net_forward.1} parent=1 // pred_region
      _
    $region45: #{gru_net_forward.1} parent=1 // pred_fallthru
      _
    // Predicated region
    $region46: #{gru_net_forward.1} parent=1 // pred_check
      _
    $region47: #{gru_net_forward.1} parent=1 // pred_check_branch
      %50 = sbr.rel (0) target = $region49
    $region48: #{gru_net_forward.1} parent=1 // pred_region
      %51 = dma.done [#allocation3], 256
    $region49: #{gru_net_forward.1} parent=1 // pred_fallthru
      _
    %v52 = vld [vmem:[%s0] sm:$0xff]
    %v53 = vld [vmem:[%s0 + $0x8] sm:$0xff]
    %v54 = vld [vmem:[#allocation2] sm:$0xff]
    %v55 = vld [vmem:[#allocation2 + $0x8] sm:$0xff]
    %v56 = vld [vmem:[%s2] sm:$0xff]
    %v57 = vld [vmem:[%s2 + $0x8] sm:$0xff]
    %v58 = vld [vmem:[%s2 + $0x10] sm:$0xff]
    %v59 = vld [vmem:[%s2 + $0x18] sm:$0xff]
    %v60 = vld [vmem:[%s3] sm:$0x1]
    %v61 = vld [vmem:[%s4] sm:$0x1]
    %v63 = vlaneseq
    %v64 = vshrl.u32 %v63, 7
    %v65 = vsub.s32 0, %v64
    %v66 = vrot.slane %v60, %v65
    %vm68 = vcmask 130048
    %v70 = vsel %vm68, %v52, 0
    %v73 = vsel %vm68, %v53, 0
    %75 = vmatprep.subr.mxu0 0.0
    %76 = vmatpush1.msra.mxu0 %v54
    %77 = vmatprep.subr.mxu0 0.0
    %78 = vmatpush1.msra.mxu0 %v55
    %79 = vmatprep.subr.mxu0 0.0
    %80 = vmatpush1.msra.mxu0 0.0
    %81 = vmatprep.subr.mxu0 0.0
    %82 = vmatpush1.msra.mxu0 0.0
    %83 = vmatprep.subr.mxu0 0.0
    %84 = vmatpush1.msra.mxu0 0.0
    %85 = vmatprep.subr.mxu0 0.0
    %86 = vmatpush1.msra.mxu0 0.0
    %87 = vmatprep.subr.mxu0 0.0
    %88 = vmatpush1.msra.mxu0 0.0
    %89 = vmatprep.subr.mxu0 0.0
    %90 = vmatpush1.msra.mxu0 0.0
    %91 = vmatprep.subr.mxu0 0.0
    %92 = vmatpush1.msra.mxu0 0.0
    %93 = vmatprep.subr.mxu0 0.0
    %94 = vmatpush1.msra.mxu0 0.0
    %95 = vmatprep.subr.mxu0 0.0
    %96 = vmatpush1.msra.mxu0 0.0
    %97 = vmatprep.subr.mxu0 0.0
    %98 = vmatpush1.msra.mxu0 0.0
    %99 = vmatprep.subr.mxu0 0.0
    %100 = vmatpush1.msra.mxu0 0.0
    %101 = vmatprep.subr.mxu0 0.0
    %102 = vmatpush1.msra.mxu0 0.0
    %103 = vmatprep.subr.mxu0 0.0
    %104 = vmatpush1.msra.mxu0 0.0
    %105 = vmatprep.subr.mxu0 0.0
    %106 = vmatpush1.msra.mxu0 0.0
    %107 = vmatprep.subr.mxu0 0.0
    %108 = vmatpush1.msra.mxu0 0.0
    %109 = vmatprep.subr.mxu0 0.0
    %110 = vmatpush1.msra.mxu0 0.0
    %111 = vmatprep.subr.mxu0 0.0
    %112 = vmatpush1.msra.mxu0 0.0
    %113 = vmatprep.subr.mxu0 0.0
    %114 = vmatpush1.msra.mxu0 0.0
    %115 = vmatprep.subr.mxu0 0.0
    %116 = vmatpush1.msra.mxu0 0.0
    %117 = vmatprep.subr.mxu0 0.0
    %118 = vmatpush1.msra.mxu0 0.0
    %119 = vmatprep.subr.mxu0 0.0
    %120 = vmatpush1.msra.mxu0 0.0
    %121 = vmatprep.subr.mxu0 0.0
    %122 = vmatpush1.msra.mxu0 0.0
    %123 = vmatprep.subr.mxu0 0.0
    %124 = vmatpush1.msra.mxu0 0.0
    %125 = vmatprep.subr.mxu0 0.0
    %126 = vmatpush1.msra.mxu0 0.0
    %127 = vmatprep.subr.mxu0 0.0
    %128 = vmatpush1.msra.mxu0 0.0
    %129 = vmatprep.subr.mxu0 0.0
    %130 = vmatpush1.msra.mxu0 0.0
    %131 = vmatprep.subr.mxu0 0.0
    %132 = vmatpush1.msra.mxu0 0.0
    %133 = vmatprep.subr.mxu0 0.0
    %134 = vmatpush1.msra.mxu0 0.0
    %135 = vmatprep.subr.mxu0 0.0
    %136 = vmatpush1.msra.mxu0 0.0
    %137 = vmatprep.subr.mxu0 0.0
    %138 = vmatpush1.msra.mxu0 0.0
    %139 = vmatprep.mubr.f32.mxu0 0.0
    %140 = vmatmul.mubr.f32.gmra.mrb[0].mxu0 %v70
    %v141 = vpop.f32.mrb[0].mxu0
    %v142 = vadd.f32 %v66, %v141
    %v143 = vpop.f32.mrb[0].mxu0
    %144 = vmatprep.mubr.f32.mxu0 0.0
    %145 = vmatmul.mubr.f32.gmra.mrb[0].mxu0 %v73
    %v146 = vpop.f32.mrb[0].mxu0
    %v147 = vadd.f32 %v66, %v146
    %v148 = vpop.f32.mrb[0].mxu0
    %149 = vdwg.mxu0
    %v151 = vlaneseq
    %v152 = vshrl.u32 %v151, 7
    %v153 = vsub.s32 0, %v152
    %v154 = vrot.slane %v61, %v153
    %vm155 = vcmask 261120
    %v157 = vsel %vm155, 0.0, 0
    %159 = vmatprep.subr.mxu0 0.0
    %160 = vmatpush1.msra.mxu0 %v56
    %161 = vmatprep.subr.mxu0 0.0
    %162 = vmatpush1.msra.mxu0 %v57
    %163 = vmatprep.subr.mxu0 0.0
    %164 = vmatpush1.msra.mxu0 %v58
    %165 = vmatprep.subr.mxu0 0.0
    %166 = vmatpush1.msra.mxu0 %v59
    %167 = vmatprep.subr.mxu0 0.0
    %168 = vmatpush1.msra.mxu0 0.0
    %169 = vmatprep.subr.mxu0 0.0
    %170 = vmatpush1.msra.mxu0 0.0
    %171 = vmatprep.subr.mxu0 0.0
    %172 = vmatpush1.msra.mxu0 0.0
    %173 = vmatprep.subr.mxu0 0.0
    %174 = vmatpush1.msra.mxu0 0.0
    %175 = vmatprep.subr.mxu0 0.0
    %176 = vmatpush1.msra.mxu0 0.0
    %177 = vmatprep.subr.mxu0 0.0
    %178 = vmatpush1.msra.mxu0 0.0
    %179 = vmatprep.subr.mxu0 0.0
    %180 = vmatpush1.msra.mxu0 0.0
    %181 = vmatprep.subr.mxu0 0.0
    %182 = vmatpush1.msra.mxu0 0.0
    %183 = vmatprep.subr.mxu0 0.0
    %184 = vmatpush1.msra.mxu0 0.0
    %185 = vmatprep.subr.mxu0 0.0
    %186 = vmatpush1.msra.mxu0 0.0
    %187 = vmatprep.subr.mxu0 0.0
    %188 = vmatpush1.msra.mxu0 0.0
    %189 = vmatprep.subr.mxu0 0.0
    %190 = vmatpush1.msra.mxu0 0.0
    %191 = vmatprep.subr.mxu0 0.0
    %192 = vmatpush1.msra.mxu0 0.0
    %193 = vmatprep.subr.mxu0 0.0
    %194 = vmatpush1.msra.mxu0 0.0
    %195 = vmatprep.subr.mxu0 0.0
    %196 = vmatpush1.msra.mxu0 0.0
    %197 = vmatprep.subr.mxu0 0.0
    %198 = vmatpush1.msra.mxu0 0.0
    %199 = vmatprep.subr.mxu0 0.0
    %200 = vmatpush1.msra.mxu0 0.0
    %201 = vmatprep.subr.mxu0 0.0
    %202 = vmatpush1.msra.mxu0 0.0
    %203 = vmatprep.subr.mxu0 0.0
    %204 = vmatpush1.msra.mxu0 0.0
    %205 = vmatprep.subr.mxu0 0.0
    %206 = vmatpush1.msra.mxu0 0.0
    %207 = vmatprep.subr.mxu0 0.0
    %208 = vmatpush1.msra.mxu0 0.0
    %209 = vmatprep.subr.mxu0 0.0
    %210 = vmatpush1.msra.mxu0 0.0
    %211 = vmatprep.subr.mxu0 0.0
    %212 = vmatpush1.msra.mxu0 0.0
    %213 = vmatprep.subr.mxu0 0.0
    %214 = vmatpush1.msra.mxu0 0.0
    %215 = vmatprep.subr.mxu0 0.0
    %216 = vmatpush1.msra.mxu0 0.0
    %217 = vmatprep.subr.mxu0 0.0
    %218 = vmatpush1.msra.mxu0 0.0
    %219 = vmatprep.subr.mxu0 0.0
    %220 = vmatpush1.msra.mxu0 0.0
    %221 = vmatprep.subr.mxu0 0.0
    %222 = vmatpush1.msra.mxu0 0.0
    %223 = vmatprep.mubr.f32.mxu0 0.0
    %224 = vmatmul.mubr.f32.gmra.mrb[0].mxu0 %v157
    %v225 = vpop.f32.mrb[0].mxu0
    %v226 = vadd.f32 0.0, %v225
    %v227 = vpop.f32.mrb[0].mxu0
    %228 = vdwg.mxu0
    %v229 = vadd.f32 %v142, %v226
    %v230 = vxor.u32 %v229, 2147483648
    %v231 = vmul.f32 %v230, 1.442695
    %v232 = vpow.pop %v231
    %v233 = vadd.f32 %v232, 1.0
    %v234 = vrcp.pop %v233
    %v235 = vmul.f32 1.0, %v234
    %236 = vrot.lane.b32.xlu0 %v154, 64
    %v237 = vpop.permute.xlu0 %236
    %v239 = vadd.f32 %v226, %v237
    %241 = vrot.lane.b32.xlu0 %v239, 64
    %v242 = vpop.permute.xlu0 %241
    %v244 = vmul.f32 %v235, %v242
    %246 = vrot.lane.b32.xlu0 %v244, 64
    %v247 = vpop.permute.xlu0 %246
    %v249 = vadd.f32 %v142, %v247
    %v250 = vtanh.pop %v249
    %v251 = vsub.f32 1.0, %v235
    %253 = vrot.lane.b32.xlu0 %v250, 96
    %v254 = vpop.permute.xlu0 %253
    %v256 = vmul.f32 %v251, %v254
    %v257 = vmul.f32 %v235, 0.0
    %v258 = vadd.f32 %v256, %v257
    %260 = vrot.lane.b32.xlu0 %v258, 96
    %v261 = vpop.permute.xlu0 %260
    %v262 = vsel %vm155, %v261, 0
    %264 = vmatprep.subr.mxu0 0.0
    %265 = vmatpush1.msra.mxu0 %v56
    %266 = vmatprep.subr.mxu0 0.0
    %267 = vmatpush1.msra.mxu0 %v57
    %268 = vmatprep.subr.mxu0 0.0
    %269 = vmatpush1.msra.mxu0 %v58
    %270 = vmatprep.subr.mxu0 0.0
    %271 = vmatpush1.msra.mxu0 %v59
    %272 = vmatprep.subr.mxu0 0.0
    %273 = vmatpush1.msra.mxu0 0.0
    %274 = vmatprep.subr.mxu0 0.0
    %275 = vmatpush1.msra.mxu0 0.0
    %276 = vmatprep.subr.mxu0 0.0
    %277 = vmatpush1.msra.mxu0 0.0
    %278 = vmatprep.subr.mxu0 0.0
    %279 = vmatpush1.msra.mxu0 0.0
    %280 = vmatprep.subr.mxu0 0.0
    %281 = vmatpush1.msra.mxu0 0.0
    %282 = vmatprep.subr.mxu0 0.0
    %283 = vmatpush1.msra.mxu0 0.0
    %284 = vmatprep.subr.mxu0 0.0
    %285 = vmatpush1.msra.mxu0 0.0
    %286 = vmatprep.subr.mxu0 0.0
    %287 = vmatpush1.msra.mxu0 0.0
    %288 = vmatprep.subr.mxu0 0.0
    %289 = vmatpush1.msra.mxu0 0.0
    %290 = vmatprep.subr.mxu0 0.0
    %291 = vmatpush1.msra.mxu0 0.0
    %292 = vmatprep.subr.mxu0 0.0
    %293 = vmatpush1.msra.mxu0 0.0
    %294 = vmatprep.subr.mxu0 0.0
    %295 = vmatpush1.msra.mxu0 0.0
    %296 = vmatprep.subr.mxu0 0.0
    %297 = vmatpush1.msra.mxu0 0.0
    %298 = vmatprep.subr.mxu0 0.0
    %299 = vmatpush1.msra.mxu0 0.0
    %300 = vmatprep.subr.mxu0 0.0
    %301 = vmatpush1.msra.mxu0 0.0
    %302 = vmatprep.subr.mxu0 0.0
    %303 = vmatpush1.msra.mxu0 0.0
    %304 = vmatprep.subr.mxu0 0.0
    %305 = vmatpush1.msra.mxu0 0.0
    %306 = vmatprep.subr.mxu0 0.0
    %307 = vmatpush1.msra.mxu0 0.0
    %308 = vmatprep.subr.mxu0 0.0
    %309 = vmatpush1.msra.mxu0 0.0
    %310 = vmatprep.subr.mxu0 0.0
    %311 = vmatpush1.msra.mxu0 0.0
    %312 = vmatprep.subr.mxu0 0.0
    %313 = vmatpush1.msra.mxu0 0.0
    %314 = vmatprep.subr.mxu0 0.0
    %315 = vmatpush1.msra.mxu0 0.0
    %316 = vmatprep.subr.mxu0 0.0
    %317 = vmatpush1.msra.mxu0 0.0
    %318 = vmatprep.subr.mxu0 0.0
    %319 = vmatpush1.msra.mxu0 0.0
    %320 = vmatprep.subr.mxu0 0.0
    %321 = vmatpush1.msra.mxu0 0.0
    %322 = vmatprep.subr.mxu0 0.0
    %323 = vmatpush1.msra.mxu0 0.0
    %324 = vmatprep.subr.mxu0 0.0
    %325 = vmatpush1.msra.mxu0 0.0
    %326 = vmatprep.subr.mxu0 0.0
    %327 = vmatpush1.msra.mxu0 0.0
    %328 = vmatprep.mubr.f32.mxu0 0.0
    %329 = vmatmul.mubr.f32.gmra.mrb[0].mxu0 %v262
    %v330 = vpop.f32.mrb[0].mxu0
    %v331 = vadd.f32 0.0, %v330
    %v332 = vpop.f32.mrb[0].mxu0
    %333 = vdwg.mxu0
    %v335 = vrot.slane %v331, 6
    %v337 = vadd.f32 %v142, %v335
    %v338 = vxor.u32 %v337, 2147483648
    %v339 = vmul.f32 %v338, 1.442695
    %v340 = vpow.pop %v339
    %v341 = vadd.f32 %v340, 1.0
    %v342 = vrcp.pop %v341
    %v343 = vmul.f32 1.0, %v342
    %v344 = vadd.f32 %v331, %v237
    %v346 = vrot.slane %v344, 6
    %347 = vrot.lane.b32.xlu0 %v346, 64
    %v348 = vpop.permute.xlu0 %347
    %v350 = vmul.f32 %v343, %v348
    %352 = vrot.lane.b32.xlu0 %v350, 64
    %v353 = vpop.permute.xlu0 %352
    %v355 = vadd.f32 %v142, %v353
    %v356 = vtanh.pop %v355
    %v357 = vsub.f32 1.0, %v343
    %359 = vrot.lane.b32.xlu0 %v356, 96
    %v360 = vpop.permute.xlu0 %359
    %v362 = vmul.f32 %v357, %v360
    %v363 = vrot.slane %v258, 6
    %v365 = vmul.f32 %v343, %v363
    %v366 = vadd.f32 %v362, %v365
    %v368 = vrot.slane %v366, 2
    %369 = vrot.lane.b32.xlu0 %v368, 96
    %v370 = vpop.permute.xlu0 %369
    %v371 = vsel %vm155, %v370, 0
    %373 = vmatprep.subr.mxu0 0.0
    %374 = vmatpush1.msra.mxu0 %v56
    %375 = vmatprep.subr.mxu0 0.0
    %376 = vmatpush1.msra.mxu0 %v57
    %377 = vmatprep.subr.mxu0 0.0
    %378 = vmatpush1.msra.mxu0 %v58
    %379 = vmatprep.subr.mxu0 0.0
    %380 = vmatpush1.msra.mxu0 %v59
    %381 = vmatprep.subr.mxu0 0.0
    %382 = vmatpush1.msra.mxu0 0.0
    %383 = vmatprep.subr.mxu0 0.0
    %384 = vmatpush1.msra.mxu0 0.0
    %385 = vmatprep.subr.mxu0 0.0
    %386 = vmatpush1.msra.mxu0 0.0
    %387 = vmatprep.subr.mxu0 0.0
    %388 = vmatpush1.msra.mxu0 0.0
    %389 = vmatprep.subr.mxu0 0.0
    %390 = vmatpush1.msra.mxu0 0.0
    %391 = vmatprep.subr.mxu0 0.0
    %392 = vmatpush1.msra.mxu0 0.0
    %393 = vmatprep.subr.mxu0 0.0
    %394 = vmatpush1.msra.mxu0 0.0
    %395 = vmatprep.subr.mxu0 0.0
    %396 = vmatpush1.msra.mxu0 0.0
    %397 = vmatprep.subr.mxu0 0.0
    %398 = vmatpush1.msra.mxu0 0.0
    %399 = vmatprep.subr.mxu0 0.0
    %400 = vmatpush1.msra.mxu0 0.0
    %401 = vmatprep.subr.mxu0 0.0
    %402 = vmatpush1.msra.mxu0 0.0
    %403 = vmatprep.subr.mxu0 0.0
    %404 = vmatpush1.msra.mxu0 0.0
    %405 = vmatprep.subr.mxu0 0.0
    %406 = vmatpush1.msra.mxu0 0.0
    %407 = vmatprep.subr.mxu0 0.0
    %408 = vmatpush1.msra.mxu0 0.0
    %409 = vmatprep.subr.mxu0 0.0
    %410 = vmatpush1.msra.mxu0 0.0
    %411 = vmatprep.subr.mxu0 0.0
    %412 = vmatpush1.msra.mxu0 0.0
    %413 = vmatprep.subr.mxu0 0.0
    %414 = vmatpush1.msra.mxu0 0.0
    %415 = vmatprep.subr.mxu0 0.0
    %416 = vmatpush1.msra.mxu0 0.0
    %417 = vmatprep.subr.mxu0 0.0
    %418 = vmatpush1.msra.mxu0 0.0
    %419 = vmatprep.subr.mxu0 0.0
    %420 = vmatpush1.msra.mxu0 0.0
    %421 = vmatprep.subr.mxu0 0.0
    %422 = vmatpush1.msra.mxu0 0.0
    %423 = vmatprep.subr.mxu0 0.0
    %424 = vmatpush1.msra.mxu0 0.0
    %425 = vmatprep.subr.mxu0 0.0
    %426 = vmatpush1.msra.mxu0 0.0
    %427 = vmatprep.subr.mxu0 0.0
    %428 = vmatpush1.msra.mxu0 0.0
    %429 = vmatprep.subr.mxu0 0.0
    %430 = vmatpush1.msra.mxu0 0.0
    %431 = vmatprep.subr.mxu0 0.0
    %432 = vmatpush1.msra.mxu0 0.0
    %433 = vmatprep.subr.mxu0 0.0
    %434 = vmatpush1.msra.mxu0 0.0
    %435 = vmatprep.subr.mxu0 0.0
    %436 = vmatpush1.msra.mxu0 0.0
    %437 = vmatprep.mubr.f32.mxu0 0.0
    %438 = vmatmul.mubr.f32.gmra.mrb[0].mxu0 %v371
    %v439 = vpop.f32.mrb[0].mxu0
    %v440 = vadd.f32 0.0, %v439
    %v441 = vpop.f32.mrb[0].mxu0
    %442 = vdwg.mxu0
    %v444 = vrot.slane %v440, 4
    %v446 = vadd.f32 %v142, %v444
    %v447 = vxor.u32 %v446, 2147483648
    %v448 = vmul.f32 %v447, 1.442695
    %v449 = vpow.pop %v448
    %v450 = vadd.f32 %v449, 1.0
    %v451 = vrcp.pop %v450
    %v452 = vmul.f32 1.0, %v451
    %v453 = vadd.f32 %v440, %v237
    %v455 = vrot.slane %v453, 4
    %456 = vrot.lane.b32.xlu0 %v455, 64
    %v457 = vpop.permute.xlu0 %456
    %v459 = vmul.f32 %v452, %v457
    %461 = vrot.lane.b32.xlu0 %v459, 64
    %v462 = vpop.permute.xlu0 %461
    %v464 = vadd.f32 %v142, %v462
    %v465 = vtanh.pop %v464
    %v466 = vsub.f32 1.0, %v452
    %468 = vrot.lane.b32.xlu0 %v465, 96
    %v469 = vpop.permute.xlu0 %468
    %v471 = vmul.f32 %v466, %v469
    %v472 = vrot.slane %v366, 6
    %v474 = vmul.f32 %v452, %v472
    %v475 = vadd.f32 %v471, %v474
    %v477 = vrot.slane %v475, 4
    %478 = vrot.lane.b32.xlu0 %v477, 96
    %v479 = vpop.permute.xlu0 %478
    %v480 = vsel %vm155, %v479, 0
    %482 = vmatprep.subr.mxu0 0.0
    %483 = vmatpush1.msra.mxu0 %v56
    %484 = vmatprep.subr.mxu0 0.0
    %485 = vmatpush1.msra.mxu0 %v57
    %486 = vmatprep.subr.mxu0 0.0
    %487 = vmatpush1.msra.mxu0 %v58
    %488 = vmatprep.subr.mxu0 0.0
    %489 = vmatpush1.msra.mxu0 %v59
    %490 = vmatprep.subr.mxu0 0.0
    %491 = vmatpush1.msra.mxu0 0.0
    %492 = vmatprep.subr.mxu0 0.0
    %493 = vmatpush1.msra.mxu0 0.0
    %494 = vmatprep.subr.mxu0 0.0
    %495 = vmatpush1.msra.mxu0 0.0
    %496 = vmatprep.subr.mxu0 0.0
    %497 = vmatpush1.msra.mxu0 0.0
    %498 = vmatprep.subr.mxu0 0.0
    %499 = vmatpush1.msra.mxu0 0.0
    %500 = vmatprep.subr.mxu0 0.0
    %501 = vmatpush1.msra.mxu0 0.0
    %502 = vmatprep.subr.mxu0 0.0
    %503 = vmatpush1.msra.mxu0 0.0
    %504 = vmatprep.subr.mxu0 0.0
    %505 = vmatpush1.msra.mxu0 0.0
    %506 = vmatprep.subr.mxu0 0.0
    %507 = vmatpush1.msra.mxu0 0.0
    %508 = vmatprep.subr.mxu0 0.0
    %509 = vmatpush1.msra.mxu0 0.0
    %510 = vmatprep.subr.mxu0 0.0
    %511 = vmatpush1.msra.mxu0 0.0
    %512 = vmatprep.subr.mxu0 0.0
    %513 = vmatpush1.msra.mxu0 0.0
    %514 = vmatprep.subr.mxu0 0.0
    %515 = vmatpush1.msra.mxu0 0.0
    %516 = vmatprep.subr.mxu0 0.0
    %517 = vmatpush1.msra.mxu0 0.0
    %518 = vmatprep.subr.mxu0 0.0
    %519 = vmatpush1.msra.mxu0 0.0
    %520 = vmatprep.subr.mxu0 0.0
    %521 = vmatpush1.msra.mxu0 0.0
    %522 = vmatprep.subr.mxu0 0.0
    %523 = vmatpush1.msra.mxu0 0.0
    %524 = vmatprep.subr.mxu0 0.0
    %525 = vmatpush1.msra.mxu0 0.0
    %526 = vmatprep.subr.mxu0 0.0
    %527 = vmatpush1.msra.mxu0 0.0
    %528 = vmatprep.subr.mxu0 0.0
    %529 = vmatpush1.msra.mxu0 0.0
    %530 = vmatprep.subr.mxu0 0.0
    %531 = vmatpush1.msra.mxu0 0.0
    %532 = vmatprep.subr.mxu0 0.0
    %533 = vmatpush1.msra.mxu0 0.0
    %534 = vmatprep.subr.mxu0 0.0
    %535 = vmatpush1.msra.mxu0 0.0
    %536 = vmatprep.subr.mxu0 0.0
    %537 = vmatpush1.msra.mxu0 0.0
    %538 = vmatprep.subr.mxu0 0.0
    %539 = vmatpush1.msra.mxu0 0.0
    %540 = vmatprep.subr.mxu0 0.0
    %541 = vmatpush1.msra.mxu0 0.0
    %542 = vmatprep.subr.mxu0 0.0
    %543 = vmatpush1.msra.mxu0 0.0
    %544 = vmatprep.subr.mxu0 0.0
    %545 = vmatpush1.msra.mxu0 0.0
    %546 = vmatprep.mubr.f32.mxu0 0.0
    %547 = vmatmul.mubr.f32.gmra.mrb[0].mxu0 %v480
    %v548 = vpop.f32.mrb[0].mxu0
    %v549 = vadd.f32 0.0, %v548
    %v550 = vpop.f32.mrb[0].mxu0
    %551 = vdwg.mxu0
    %v553 = vrot.slane %v549, 2
    %v555 = vadd.f32 %v142, %v553
    %v556 = vxor.u32 %v555, 2147483648
    %v557 = vmul.f32 %v556, 1.442695
    %v558 = vpow.pop %v557
    %v559 = vadd.f32 %v558, 1.0
    %v560 = vrcp.pop %v559
    %v561 = vmul.f32 1.0, %v560
    %v562 = vadd.f32 %v549, %v237
    %v564 = vrot.slane %v562, 2
    %565 = vrot.lane.b32.xlu0 %v564, 64
    %v566 = vpop.permute.xlu0 %565
    %v568 = vmul.f32 %v561, %v566
    %570 = vrot.lane.b32.xlu0 %v568, 64
    %v571 = vpop.permute.xlu0 %570
    %v573 = vadd.f32 %v142, %v571
    %v574 = vtanh.pop %v573
    %v575 = vsub.f32 1.0, %v561
    %577 = vrot.lane.b32.xlu0 %v574, 96
    %v578 = vpop.permute.xlu0 %577
    %v580 = vmul.f32 %v575, %v578
    %v581 = vrot.slane %v475, 6
    %v583 = vmul.f32 %v561, %v581
    %v584 = vadd.f32 %v580, %v583
    %v586 = vrot.slane %v584, 6
    %587 = vrot.lane.b32.xlu0 %v586, 96
    %v588 = vpop.permute.xlu0 %587
    %v589 = vsel %vm155, %v588, 0
    %591 = vmatprep.subr.mxu0 0.0
    %592 = vmatpush1.msra.mxu0 %v56
    %593 = vmatprep.subr.mxu0 0.0
    %594 = vmatpush1.msra.mxu0 %v57
    %595 = vmatprep.subr.mxu0 0.0
    %596 = vmatpush1.msra.mxu0 %v58
    %597 = vmatprep.subr.mxu0 0.0
    %598 = vmatpush1.msra.mxu0 %v59
    %599 = vmatprep.subr.mxu0 0.0
    %600 = vmatpush1.msra.mxu0 0.0
    %601 = vmatprep.subr.mxu0 0.0
    %602 = vmatpush1.msra.mxu0 0.0
    %603 = vmatprep.subr.mxu0 0.0
    %604 = vmatpush1.msra.mxu0 0.0
    %605 = vmatprep.subr.mxu0 0.0
    %606 = vmatpush1.msra.mxu0 0.0
    %607 = vmatprep.subr.mxu0 0.0
    %608 = vmatpush1.msra.mxu0 0.0
    %609 = vmatprep.subr.mxu0 0.0
    %610 = vmatpush1.msra.mxu0 0.0
    %611 = vmatprep.subr.mxu0 0.0
    %612 = vmatpush1.msra.mxu0 0.0
    %613 = vmatprep.subr.mxu0 0.0
    %614 = vmatpush1.msra.mxu0 0.0
    %615 = vmatprep.subr.mxu0 0.0
    %616 = vmatpush1.msra.mxu0 0.0
    %617 = vmatprep.subr.mxu0 0.0
    %618 = vmatpush1.msra.mxu0 0.0
    %619 = vmatprep.subr.mxu0 0.0
    %620 = vmatpush1.msra.mxu0 0.0
    %621 = vmatprep.subr.mxu0 0.0
    %622 = vmatpush1.msra.mxu0 0.0
    %623 = vmatprep.subr.mxu0 0.0
    %624 = vmatpush1.msra.mxu0 0.0
    %625 = vmatprep.subr.mxu0 0.0
    %626 = vmatpush1.msra.mxu0 0.0
    %627 = vmatprep.subr.mxu0 0.0
    %628 = vmatpush1.msra.mxu0 0.0
    %629 = vmatprep.subr.mxu0 0.0
    %630 = vmatpush1.msra.mxu0 0.0
    %631 = vmatprep.subr.mxu0 0.0
    %632 = vmatpush1.msra.mxu0 0.0
    %633 = vmatprep.subr.mxu0 0.0
    %634 = vmatpush1.msra.mxu0 0.0
    %635 = vmatprep.subr.mxu0 0.0
    %636 = vmatpush1.msra.mxu0 0.0
    %637 = vmatprep.subr.mxu0 0.0
    %638 = vmatpush1.msra.mxu0 0.0
    %639 = vmatprep.subr.mxu0 0.0
    %640 = vmatpush1.msra.mxu0 0.0
    %641 = vmatprep.subr.mxu0 0.0
    %642 = vmatpush1.msra.mxu0 0.0
    %643 = vmatprep.subr.mxu0 0.0
    %644 = vmatpush1.msra.mxu0 0.0
    %645 = vmatprep.subr.mxu0 0.0
    %646 = vmatpush1.msra.mxu0 0.0
    %647 = vmatprep.subr.mxu0 0.0
    %648 = vmatpush1.msra.mxu0 0.0
    %649 = vmatprep.subr.mxu0 0.0
    %650 = vmatpush1.msra.mxu0 0.0
    %651 = vmatprep.subr.mxu0 0.0
    %652 = vmatpush1.msra.mxu0 0.0
    %653 = vmatprep.subr.mxu0 0.0
    %654 = vmatpush1.msra.mxu0 0.0
    %655 = vmatprep.mubr.f32.mxu0 0.0
    %656 = vmatmul.mubr.f32.gmra.mrb[0].mxu0 %v589
    %v657 = vpop.f32.mrb[0].mxu0
    %v658 = vadd.f32 0.0, %v657
    %v659 = vpop.f32.mrb[0].mxu0
    %660 = vdwg.mxu0
    %v661 = vadd.f32 %v147, %v658
    %v662 = vxor.u32 %v661, 2147483648
    %v663 = vmul.f32 %v662, 1.442695
    %v664 = vpow.pop %v663
    %v665 = vadd.f32 %v664, 1.0
    %v666 = vrcp.pop %v665
    %v667 = vmul.f32 1.0, %v666
    %v668 = vadd.f32 %v658, %v237
    %670 = vrot.lane.b32.xlu0 %v668, 64
    %v671 = vpop.permute.xlu0 %670
    %v673 = vmul.f32 %v667, %v671
    %675 = vrot.lane.b32.xlu0 %v673, 64
    %v676 = vpop.permute.xlu0 %675
    %v678 = vadd.f32 %v147, %v676
    %v679 = vtanh.pop %v678
    %v680 = vsub.f32 1.0, %v667
    %682 = vrot.lane.b32.xlu0 %v679, 96
    %v683 = vpop.permute.xlu0 %682
    %v685 = vmul.f32 %v680, %v683
    %v687 = vmul.f32 %v667, %v586
    %v688 = vadd.f32 %v685, %v687
    %690 = vrot.lane.b32.xlu0 %v688, 96
    %v691 = vpop.permute.xlu0 %690
    %v692 = vsel %vm155, %v691, 0
    %694 = vmatprep.subr.mxu0 0.0
    %695 = vmatpush1.msra.mxu0 %v56
    %696 = vmatprep.subr.mxu0 0.0
    %697 = vmatpush1.msra.mxu0 %v57
    %698 = vmatprep.subr.mxu0 0.0
    %699 = vmatpush1.msra.mxu0 %v58
    %700 = vmatprep.subr.mxu0 0.0
    %701 = vmatpush1.msra.mxu0 %v59
    %702 = vmatprep.subr.mxu0 0.0
    %703 = vmatpush1.msra.mxu0 0.0
    %704 = vmatprep.subr.mxu0 0.0
    %705 = vmatpush1.msra.mxu0 0.0
    %706 = vmatprep.subr.mxu0 0.0
    %707 = vmatpush1.msra.mxu0 0.0
    %708 = vmatprep.subr.mxu0 0.0
    %709 = vmatpush1.msra.mxu0 0.0
    %710 = vmatprep.subr.mxu0 0.0
    %711 = vmatpush1.msra.mxu0 0.0
    %712 = vmatprep.subr.mxu0 0.0
    %713 = vmatpush1.msra.mxu0 0.0
    %714 = vmatprep.subr.mxu0 0.0
    %715 = vmatpush1.msra.mxu0 0.0
    %716 = vmatprep.subr.mxu0 0.0
    %717 = vmatpush1.msra.mxu0 0.0
    %718 = vmatprep.subr.mxu0 0.0
    %719 = vmatpush1.msra.mxu0 0.0
    %720 = vmatprep.subr.mxu0 0.0
    %721 = vmatpush1.msra.mxu0 0.0
    %722 = vmatprep.subr.mxu0 0.0
    %723 = vmatpush1.msra.mxu0 0.0
    %724 = vmatprep.subr.mxu0 0.0
    %725 = vmatpush1.msra.mxu0 0.0
    %726 = vmatprep.subr.mxu0 0.0
    %727 = vmatpush1.msra.mxu0 0.0
    %728 = vmatprep.subr.mxu0 0.0
    %729 = vmatpush1.msra.mxu0 0.0
    %730 = vmatprep.subr.mxu0 0.0
    %731 = vmatpush1.msra.mxu0 0.0
    %732 = vmatprep.subr.mxu0 0.0
    %733 = vmatpush1.msra.mxu0 0.0
    %734 = vmatprep.subr.mxu0 0.0
    %735 = vmatpush1.msra.mxu0 0.0
    %736 = vmatprep.subr.mxu0 0.0
    %737 = vmatpush1.msra.mxu0 0.0
    %738 = vmatprep.subr.mxu0 0.0
    %739 = vmatpush1.msra.mxu0 0.0
    %740 = vmatprep.subr.mxu0 0.0
    %741 = vmatpush1.msra.mxu0 0.0
    %742 = vmatprep.subr.mxu0 0.0
    %743 = vmatpush1.msra.mxu0 0.0
    %744 = vmatprep.subr.mxu0 0.0
    %745 = vmatpush1.msra.mxu0 0.0
    %746 = vmatprep.subr.mxu0 0.0
    %747 = vmatpush1.msra.mxu0 0.0
    %748 = vmatprep.subr.mxu0 0.0
    %749 = vmatpush1.msra.mxu0 0.0
    %750 = vmatprep.subr.mxu0 0.0
    %751 = vmatpush1.msra.mxu0 0.0
    %752 = vmatprep.subr.mxu0 0.0
    %753 = vmatpush1.msra.mxu0 0.0
    %754 = vmatprep.subr.mxu0 0.0
    %755 = vmatpush1.msra.mxu0 0.0
    %756 = vmatprep.subr.mxu0 0.0
    %757 = vmatpush1.msra.mxu0 0.0
    %758 = vmatprep.mubr.f32.mxu0 0.0
    %759 = vmatmul.mubr.f32.gmra.mrb[0].mxu0 %v692
    %v760 = vpop.f32.mrb[0].mxu0
    %v761 = vadd.f32 0.0, %v760
    %v762 = vpop.f32.mrb[0].mxu0
    %763 = vdwg.mxu0
    %v765 = vrot.slane %v761, 6
    %v767 = vadd.f32 %v147, %v765
    %v768 = vxor.u32 %v767, 2147483648
    %v769 = vmul.f32 %v768, 1.442695
    %v770 = vpow.pop %v769
    %v771 = vadd.f32 %v770, 1.0
    %v772 = vrcp.pop %v771
    %v773 = vmul.f32 1.0, %v772
    %v774 = vadd.f32 %v761, %v237
    %v776 = vrot.slane %v774, 6
    %777 = vrot.lane.b32.xlu0 %v776, 64
    %v778 = vpop.permute.xlu0 %777
    %v780 = vmul.f32 %v773, %v778
    %782 = vrot.lane.b32.xlu0 %v780, 64
    %v783 = vpop.permute.xlu0 %782
    %v785 = vadd.f32 %v147, %v783
    %v786 = vtanh.pop %v785
    %v787 = vsub.f32 1.0, %v773
    %789 = vrot.lane.b32.xlu0 %v786, 96
    %v790 = vpop.permute.xlu0 %789
    %v792 = vmul.f32 %v787, %v790
    %v793 = vrot.slane %v688, 6
    %v795 = vmul.f32 %v773, %v793
    %v796 = vadd.f32 %v792, %v795
    %v798 = vrot.slane %v796, 2
    %799 = vrot.lane.b32.xlu0 %v798, 96
    %v800 = vpop.permute.xlu0 %799
    %v801 = vsel %vm155, %v800, 0
    %803 = vmatprep.subr.mxu0 0.0
    %804 = vmatpush1.msra.mxu0 %v56
    %805 = vmatprep.subr.mxu0 0.0
    %806 = vmatpush1.msra.mxu0 %v57
    %807 = vmatprep.subr.mxu0 0.0
    %808 = vmatpush1.msra.mxu0 %v58
    %809 = vmatprep.subr.mxu0 0.0
    %810 = vmatpush1.msra.mxu0 %v59
    %811 = vmatprep.subr.mxu0 0.0
    %812 = vmatpush1.msra.mxu0 0.0
    %813 = vmatprep.subr.mxu0 0.0
    %814 = vmatpush1.msra.mxu0 0.0
    %815 = vmatprep.subr.mxu0 0.0
    %816 = vmatpush1.msra.mxu0 0.0
    %817 = vmatprep.subr.mxu0 0.0
    %818 = vmatpush1.msra.mxu0 0.0
    %819 = vmatprep.subr.mxu0 0.0
    %820 = vmatpush1.msra.mxu0 0.0
    %821 = vmatprep.subr.mxu0 0.0
    %822 = vmatpush1.msra.mxu0 0.0
    %823 = vmatprep.subr.mxu0 0.0
    %824 = vmatpush1.msra.mxu0 0.0
    %825 = vmatprep.subr.mxu0 0.0
    %826 = vmatpush1.msra.mxu0 0.0
    %827 = vmatprep.subr.mxu0 0.0
    %828 = vmatpush1.msra.mxu0 0.0
    %829 = vmatprep.subr.mxu0 0.0
    %830 = vmatpush1.msra.mxu0 0.0
    %831 = vmatprep.subr.mxu0 0.0
    %832 = vmatpush1.msra.mxu0 0.0
    %833 = vmatprep.subr.mxu0 0.0
    %834 = vmatpush1.msra.mxu0 0.0
    %835 = vmatprep.subr.mxu0 0.0
    %836 = vmatpush1.msra.mxu0 0.0
    %837 = vmatprep.subr.mxu0 0.0
    %838 = vmatpush1.msra.mxu0 0.0
    %839 = vmatprep.subr.mxu0 0.0
    %840 = vmatpush1.msra.mxu0 0.0
    %841 = vmatprep.subr.mxu0 0.0
    %842 = vmatpush1.msra.mxu0 0.0
    %843 = vmatprep.subr.mxu0 0.0
    %844 = vmatpush1.msra.mxu0 0.0
    %845 = vmatprep.subr.mxu0 0.0
    %846 = vmatpush1.msra.mxu0 0.0
    %847 = vmatprep.subr.mxu0 0.0
    %848 = vmatpush1.msra.mxu0 0.0
    %849 = vmatprep.subr.mxu0 0.0
    %850 = vmatpush1.msra.mxu0 0.0
    %851 = vmatprep.subr.mxu0 0.0
    %852 = vmatpush1.msra.mxu0 0.0
    %853 = vmatprep.subr.mxu0 0.0
    %854 = vmatpush1.msra.mxu0 0.0
    %855 = vmatprep.subr.mxu0 0.0
    %856 = vmatpush1.msra.mxu0 0.0
    %857 = vmatprep.subr.mxu0 0.0
    %858 = vmatpush1.msra.mxu0 0.0
    %859 = vmatprep.subr.mxu0 0.0
    %860 = vmatpush1.msra.mxu0 0.0
    %861 = vmatprep.subr.mxu0 0.0
    %862 = vmatpush1.msra.mxu0 0.0
    %863 = vmatprep.subr.mxu0 0.0
    %864 = vmatpush1.msra.mxu0 0.0
    %865 = vmatprep.subr.mxu0 0.0
    %866 = vmatpush1.msra.mxu0 0.0
    %867 = vmatprep.mubr.f32.mxu0 0.0
    %868 = vmatmul.mubr.f32.gmra.mrb[0].mxu0 %v801
    %v869 = vpop.f32.mrb[0].mxu0
    %v870 = vadd.f32 0.0, %v869
    %v871 = vpop.f32.mrb[0].mxu0
    %872 = vdwg.mxu0
    %v874 = vrot.slane %v870, 4
    %v876 = vadd.f32 %v147, %v874
    %v877 = vxor.u32 %v876, 2147483648
    %v878 = vmul.f32 %v877, 1.442695
    %v879 = vpow.pop %v878
    %v880 = vadd.f32 %v879, 1.0
    %v881 = vrcp.pop %v880
    %v882 = vmul.f32 1.0, %v881
    %v883 = vadd.f32 %v870, %v237
    %v885 = vrot.slane %v883, 4
    %886 = vrot.lane.b32.xlu0 %v885, 64
    %v887 = vpop.permute.xlu0 %886
    %v889 = vmul.f32 %v882, %v887
    %891 = vrot.lane.b32.xlu0 %v889, 64
    %v892 = vpop.permute.xlu0 %891
    %v894 = vadd.f32 %v147, %v892
    %v895 = vtanh.pop %v894
    %v896 = vsub.f32 1.0, %v882
    %898 = vrot.lane.b32.xlu0 %v895, 96
    %v899 = vpop.permute.xlu0 %898
    %v901 = vmul.f32 %v896, %v899
    %v902 = vrot.slane %v796, 6
    %v904 = vmul.f32 %v882, %v902
    %v905 = vadd.f32 %v901, %v904
    %v907 = vrot.slane %v905, 4
    %908 = vrot.lane.b32.xlu0 %v907, 96
    %v909 = vpop.permute.xlu0 %908
    %v910 = vsel %vm155, %v909, 0
    %912 = vmatprep.subr.mxu0 0.0
    %913 = vmatpush1.msra.mxu0 %v56
    %914 = vmatprep.subr.mxu0 0.0
    %915 = vmatpush1.msra.mxu0 %v57
    %916 = vmatprep.subr.mxu0 0.0
    %917 = vmatpush1.msra.mxu0 %v58
    %918 = vmatprep.subr.mxu0 0.0
    %919 = vmatpush1.msra.mxu0 %v59
    %920 = vmatprep.subr.mxu0 0.0
    %921 = vmatpush1.msra.mxu0 0.0
    %922 = vmatprep.subr.mxu0 0.0
    %923 = vmatpush1.msra.mxu0 0.0
    %924 = vmatprep.subr.mxu0 0.0
    %925 = vmatpush1.msra.mxu0 0.0
    %926 = vmatprep.subr.mxu0 0.0
    %927 = vmatpush1.msra.mxu0 0.0
    %928 = vmatprep.subr.mxu0 0.0
    %929 = vmatpush1.msra.mxu0 0.0
    %930 = vmatprep.subr.mxu0 0.0
    %931 = vmatpush1.msra.mxu0 0.0
    %932 = vmatprep.subr.mxu0 0.0
    %933 = vmatpush1.msra.mxu0 0.0
    %934 = vmatprep.subr.mxu0 0.0
    %935 = vmatpush1.msra.mxu0 0.0
    %936 = vmatprep.subr.mxu0 0.0
    %937 = vmatpush1.msra.mxu0 0.0
    %938 = vmatprep.subr.mxu0 0.0
    %939 = vmatpush1.msra.mxu0 0.0
    %940 = vmatprep.subr.mxu0 0.0
    %941 = vmatpush1.msra.mxu0 0.0
    %942 = vmatprep.subr.mxu0 0.0
    %943 = vmatpush1.msra.mxu0 0.0
    %944 = vmatprep.subr.mxu0 0.0
    %945 = vmatpush1.msra.mxu0 0.0
    %946 = vmatprep.subr.mxu0 0.0
    %947 = vmatpush1.msra.mxu0 0.0
    %948 = vmatprep.subr.mxu0 0.0
    %949 = vmatpush1.msra.mxu0 0.0
    %950 = vmatprep.subr.mxu0 0.0
    %951 = vmatpush1.msra.mxu0 0.0
    %952 = vmatprep.subr.mxu0 0.0
    %953 = vmatpush1.msra.mxu0 0.0
    %954 = vmatprep.subr.mxu0 0.0
    %955 = vmatpush1.msra.mxu0 0.0
    %956 = vmatprep.subr.mxu0 0.0
    %957 = vmatpush1.msra.mxu0 0.0
    %958 = vmatprep.subr.mxu0 0.0
    %959 = vmatpush1.msra.mxu0 0.0
    %960 = vmatprep.subr.mxu0 0.0
    %961 = vmatpush1.msra.mxu0 0.0
    %962 = vmatprep.subr.mxu0 0.0
    %963 = vmatpush1.msra.mxu0 0.0
    %964 = vmatprep.subr.mxu0 0.0
    %965 = vmatpush1.msra.mxu0 0.0
    %966 = vmatprep.subr.mxu0 0.0
    %967 = vmatpush1.msra.mxu0 0.0
    %968 = vmatprep.subr.mxu0 0.0
    %969 = vmatpush1.msra.mxu0 0.0
    %970 = vmatprep.subr.mxu0 0.0
    %971 = vmatpush1.msra.mxu0 0.0
    %972 = vmatprep.subr.mxu0 0.0
    %973 = vmatpush1.msra.mxu0 0.0
    %974 = vmatprep.subr.mxu0 0.0
    %975 = vmatpush1.msra.mxu0 0.0
    %976 = vmatprep.mubr.f32.mxu0 0.0
    %977 = vmatmul.mubr.f32.gmra.mrb[0].mxu0 %v910
    %v978 = vpop.f32.mrb[0].mxu0
    %v979 = vadd.f32 0.0, %v978
    %v980 = vpop.f32.mrb[0].mxu0
    %981 = vdwg.mxu0
    %v983 = vrot.slane %v979, 2
    %v985 = vadd.f32 %v147, %v983
    %v986 = vxor.u32 %v985, 2147483648
    %v987 = vmul.f32 %v986, 1.442695
    %v988 = vpow.pop %v987
    %v989 = vadd.f32 %v988, 1.0
    %v990 = vrcp.pop %v989
    %v991 = vmul.f32 1.0, %v990
    %v992 = vadd.f32 %v979, %v237
    %v994 = vrot.slane %v992, 2
    %995 = vrot.lane.b32.xlu0 %v994, 64
    %v996 = vpop.permute.xlu0 %995
    %v998 = vmul.f32 %v991, %v996
    %1000 = vrot.lane.b32.xlu0 %v998, 64
    %v1001 = vpop.permute.xlu0 %1000
    %v1003 = vadd.f32 %v147, %v1001
    %v1004 = vtanh.pop %v1003
    %v1005 = vsub.f32 1.0, %v991
    %1007 = vrot.lane.b32.xlu0 %v1004, 96
    %v1008 = vpop.permute.xlu0 %1007
    %v1010 = vmul.f32 %v1005, %v1008
    %v1011 = vrot.slane %v905, 6
    %v1013 = vmul.f32 %v991, %v1011
    %v1014 = vadd.f32 %v1010, %v1013
    %vm1015 = vcmask 1041408
    %v1016 = vsel %vm1015, %v258, %v366
    %vm1017 = vcmask 1043456
    %v1018 = vsel %vm1017, %v1016, %v475
    %vm1019 = vcmask 1045504
    %v1020 = vsel %vm1019, %v1018, %v584
    %v1021 = vsel %vm1015, %v688, %v796
    %v1022 = vsel %vm1017, %v1021, %v905
    %v1023 = vsel %vm1019, %v1022, %v1014
    %v1024 = vld [vmem:[%s5] sm:$0xff]
    %v1025 = vld [vmem:[%s5 + $0x8] sm:$0xff]
    %v1026 = vld [vmem:[%s5 + $0x10] sm:$0xff]
    %v1027 = vld [vmem:[%s5 + $0x18] sm:$0xff]
    %v1028 = vld [vmem:[%s6] sm:$0xff]
    %v1029 = vld [vmem:[%s6 + $0x8] sm:$0xff]
    %v1030 = vld [vmem:[%s6 + $0x10] sm:$0xff]
    %v1031 = vld [vmem:[%s6 + $0x18] sm:$0xff]
    %v1032 = vld [vmem:[%s7] sm:$0x1]
    %v1033 = vld [vmem:[%s8] sm:$0x1]
    %v1035 = vlaneseq
    %v1036 = vshrl.u32 %v1035, 7
    %v1037 = vsub.s32 0, %v1036
    %v1038 = vrot.slane %v1032, %v1037
    %1042 = vrot.lane.b32.xlu0 %v1020, 96
    %v1043 = vpop.permute.xlu0 %1042
    %1044 = vrot.lane.b32.xlu0 %v1023, 96
    %v1045 = vpop.permute.xlu0 %1044
    %v1046 = vsel %vm155, %v1043, 0
    %v1048 = vsel %vm155, %v1045, 0
    %1050 = vmatprep.subr.mxu0 0.0
    %1051 = vmatpush1.msra.mxu0 %v1024
    %1052 = vmatprep.subr.mxu0 0.0
    %1053 = vmatpush1.msra.mxu0 %v1025
    %1054 = vmatprep.subr.mxu0 0.0
    %1055 = vmatpush1.msra.mxu0 %v1026
    %1056 = vmatprep.subr.mxu0 0.0
    %1057 = vmatpush1.msra.mxu0 %v1027
    %1058 = vmatprep.subr.mxu0 0.0
    %1059 = vmatpush1.msra.mxu0 0.0
    %1060 = vmatprep.subr.mxu0 0.0
    %1061 = vmatpush1.msra.mxu0 0.0
    %1062 = vmatprep.subr.mxu0 0.0
    %1063 = vmatpush1.msra.mxu0 0.0
    %1064 = vmatprep.subr.mxu0 0.0
    %1065 = vmatpush1.msra.mxu0 0.0
    %1066 = vmatprep.subr.mxu0 0.0
    %1067 = vmatpush1.msra.mxu0 0.0
    %1068 = vmatprep.subr.mxu0 0.0
    %1069 = vmatpush1.msra.mxu0 0.0
    %1070 = vmatprep.subr.mxu0 0.0
    %1071 = vmatpush1.msra.mxu0 0.0
    %1072 = vmatprep.subr.mxu0 0.0
    %1073 = vmatpush1.msra.mxu0 0.0
    %1074 = vmatprep.subr.mxu0 0.0
    %1075 = vmatpush1.msra.mxu0 0.0
    %1076 = vmatprep.subr.mxu0 0.0
    %1077 = vmatpush1.msra.mxu0 0.0
    %1078 = vmatprep.subr.mxu0 0.0
    %1079 = vmatpush1.msra.mxu0 0.0
    %1080 = vmatprep.subr.mxu0 0.0
    %1081 = vmatpush1.msra.mxu0 0.0
    %1082 = vmatprep.subr.mxu0 0.0
    %1083 = vmatpush1.msra.mxu0 0.0
    %1084 = vmatprep.subr.mxu0 0.0
    %1085 = vmatpush1.msra.mxu0 0.0
    %1086 = vmatprep.subr.mxu0 0.0
    %1087 = vmatpush1.msra.mxu0 0.0
    %1088 = vmatprep.subr.mxu0 0.0
    %1089 = vmatpush1.msra.mxu0 0.0
    %1090 = vmatprep.subr.mxu0 0.0
    %1091 = vmatpush1.msra.mxu0 0.0
    %1092 = vmatprep.subr.mxu0 0.0
    %1093 = vmatpush1.msra.mxu0 0.0
    %1094 = vmatprep.subr.mxu0 0.0
    %1095 = vmatpush1.msra.mxu0 0.0
    %1096 = vmatprep.subr.mxu0 0.0
    %1097 = vmatpush1.msra.mxu0 0.0
    %1098 = vmatprep.subr.mxu0 0.0
    %1099 = vmatpush1.msra.mxu0 0.0
    %1100 = vmatprep.subr.mxu0 0.0
    %1101 = vmatpush1.msra.mxu0 0.0
    %1102 = vmatprep.subr.mxu0 0.0
    %1103 = vmatpush1.msra.mxu0 0.0
    %1104 = vmatprep.subr.mxu0 0.0
    %1105 = vmatpush1.msra.mxu0 0.0
    %1106 = vmatprep.subr.mxu0 0.0
    %1107 = vmatpush1.msra.mxu0 0.0
    %1108 = vmatprep.subr.mxu0 0.0
    %1109 = vmatpush1.msra.mxu0 0.0
    %1110 = vmatprep.subr.mxu0 0.0
    %1111 = vmatpush1.msra.mxu0 0.0
    %1112 = vmatprep.subr.mxu0 0.0
    %1113 = vmatpush1.msra.mxu0 0.0
    %1114 = vmatprep.mubr.f32.mxu0 0.0
    %1115 = vmatmul.mubr.f32.gmra.mrb[0].mxu0 %v1046
    %v1116 = vpop.f32.mrb[0].mxu0
    %v1117 = vadd.f32 %v1038, %v1116
    %v1118 = vpop.f32.mrb[0].mxu0
    %1119 = vmatprep.mubr.f32.mxu0 0.0
    %1120 = vmatmul.mubr.f32.gmra.mrb[0].mxu0 %v1048
    %v1121 = vpop.f32.mrb[0].mxu0
    %v1122 = vadd.f32 %v1038, %v1121
    %v1123 = vpop.f32.mrb[0].mxu0
    %1124 = vdwg.mxu0
    %v1126 = vlaneseq
    %v1127 = vshrl.u32 %v1126, 7
    %v1128 = vsub.s32 0, %v1127
    %v1129 = vrot.slane %v1033, %v1128
    %1130 = vmatprep.subr.mxu0 0.0
    %1131 = vmatpush1.msra.mxu0 %v1028
    %1132 = vmatprep.subr.mxu0 0.0
    %1133 = vmatpush1.msra.mxu0 %v1029
    %1134 = vmatprep.subr.mxu0 0.0
    %1135 = vmatpush1.msra.mxu0 %v1030
    %1136 = vmatprep.subr.mxu0 0.0
    %1137 = vmatpush1.msra.mxu0 %v1031
    %1138 = vmatprep.subr.mxu0 0.0
    %1139 = vmatpush1.msra.mxu0 0.0
    %1140 = vmatprep.subr.mxu0 0.0
    %1141 = vmatpush1.msra.mxu0 0.0
    %1142 = vmatprep.subr.mxu0 0.0
    %1143 = vmatpush1.msra.mxu0 0.0
    %1144 = vmatprep.subr.mxu0 0.0
    %1145 = vmatpush1.msra.mxu0 0.0
    %1146 = vmatprep.subr.mxu0 0.0
    %1147 = vmatpush1.msra.mxu0 0.0
    %1148 = vmatprep.subr.mxu0 0.0
    %1149 = vmatpush1.msra.mxu0 0.0
    %1150 = vmatprep.subr.mxu0 0.0
    %1151 = vmatpush1.msra.mxu0 0.0
    %1152 = vmatprep.subr.mxu0 0.0
    %1153 = vmatpush1.msra.mxu0 0.0
    %1154 = vmatprep.subr.mxu0 0.0
    %1155 = vmatpush1.msra.mxu0 0.0
    %1156 = vmatprep.subr.mxu0 0.0
    %1157 = vmatpush1.msra.mxu0 0.0
    %1158 = vmatprep.subr.mxu0 0.0
    %1159 = vmatpush1.msra.mxu0 0.0
    %1160 = vmatprep.subr.mxu0 0.0
    %1161 = vmatpush1.msra.mxu0 0.0
    %1162 = vmatprep.subr.mxu0 0.0
    %1163 = vmatpush1.msra.mxu0 0.0
    %1164 = vmatprep.subr.mxu0 0.0
    %1165 = vmatpush1.msra.mxu0 0.0
    %1166 = vmatprep.subr.mxu0 0.0
    %1167 = vmatpush1.msra.mxu0 0.0
    %1168 = vmatprep.subr.mxu0 0.0
    %1169 = vmatpush1.msra.mxu0 0.0
    %1170 = vmatprep.subr.mxu0 0.0
    %1171 = vmatpush1.msra.mxu0 0.0
    %1172 = vmatprep.subr.mxu0 0.0
    %1173 = vmatpush1.msra.mxu0 0.0
    %1174 = vmatprep.subr.mxu0 0.0
    %1175 = vmatpush1.msra.mxu0 0.0
    %1176 = vmatprep.subr.mxu0 0.0
    %1177 = vmatpush1.msra.mxu0 0.0
    %1178 = vmatprep.subr.mxu0 0.0
    %1179 = vmatpush1.msra.mxu0 0.0
    %1180 = vmatprep.subr.mxu0 0.0
    %1181 = vmatpush1.msra.mxu0 0.0
    %1182 = vmatprep.subr.mxu0 0.0
    %1183 = vmatpush1.msra.mxu0 0.0
    %1184 = vmatprep.subr.mxu0 0.0
    %1185 = vmatpush1.msra.mxu0 0.0
    %1186 = vmatprep.subr.mxu0 0.0
    %1187 = vmatpush1.msra.mxu0 0.0
    %1188 = vmatprep.subr.mxu0 0.0
    %1189 = vmatpush1.msra.mxu0 0.0
    %1190 = vmatprep.subr.mxu0 0.0
    %1191 = vmatpush1.msra.mxu0 0.0
    %1192 = vmatprep.subr.mxu0 0.0
    %1193 = vmatpush1.msra.mxu0 0.0
    %1194 = vmatprep.mubr.f32.mxu0 0.0
    %1195 = vmatmul.mubr.f32.gmra.mrb[0].mxu0 %v157
    %v1196 = vpop.f32.mrb[0].mxu0
    %v1197 = vadd.f32 0.0, %v1196
    %v1198 = vpop.f32.mrb[0].mxu0
    %1199 = vdwg.mxu0
    %v1200 = vadd.f32 %v1117, %v1197
    %v1201 = vxor.u32 %v1200, 2147483648
    %v1202 = vmul.f32 %v1201, 1.442695
    %v1203 = vpow.pop %v1202
    %v1204 = vadd.f32 %v1203, 1.0
    %v1205 = vrcp.pop %v1204
    %v1206 = vmul.f32 1.0, %v1205
    %1207 = vrot.lane.b32.xlu0 %v1129, 64
    %v1208 = vpop.permute.xlu0 %1207
    %v1210 = vadd.f32 %v1197, %v1208
    %1212 = vrot.lane.b32.xlu0 %v1210, 64
    %v1213 = vpop.permute.xlu0 %1212
    %v1215 = vmul.f32 %v1206, %v1213
    %1217 = vrot.lane.b32.xlu0 %v1215, 64
    %v1218 = vpop.permute.xlu0 %1217
    %v1220 = vadd.f32 %v1117, %v1218
    %v1221 = vtanh.pop %v1220
    %v1222 = vsub.f32 1.0, %v1206
    %1224 = vrot.lane.b32.xlu0 %v1221, 96
    %v1225 = vpop.permute.xlu0 %1224
    %v1227 = vmul.f32 %v1222, %v1225
    %v1228 = vmul.f32 %v1206, 0.0
    %v1229 = vadd.f32 %v1227, %v1228
    %1231 = vrot.lane.b32.xlu0 %v1229, 96
    %v1232 = vpop.permute.xlu0 %1231
    %v1233 = vsel %vm155, %v1232, 0
    %1235 = vmatprep.subr.mxu0 0.0
    %1236 = vmatpush1.msra.mxu0 %v1028
    %1237 = vmatprep.subr.mxu0 0.0
    %1238 = vmatpush1.msra.mxu0 %v1029
    %1239 = vmatprep.subr.mxu0 0.0
    %1240 = vmatpush1.msra.mxu0 %v1030
    %1241 = vmatprep.subr.mxu0 0.0
    %1242 = vmatpush1.msra.mxu0 %v1031
    %1243 = vmatprep.subr.mxu0 0.0
    %1244 = vmatpush1.msra.mxu0 0.0
    %1245 = vmatprep.subr.mxu0 0.0
    %1246 = vmatpush1.msra.mxu0 0.0
    %1247 = vmatprep.subr.mxu0 0.0
    %1248 = vmatpush1.msra.mxu0 0.0
    %1249 = vmatprep.subr.mxu0 0.0
    %1250 = vmatpush1.msra.mxu0 0.0
    %1251 = vmatprep.subr.mxu0 0.0
    %1252 = vmatpush1.msra.mxu0 0.0
    %1253 = vmatprep.subr.mxu0 0.0
    %1254 = vmatpush1.msra.mxu0 0.0
    %1255 = vmatprep.subr.mxu0 0.0
    %1256 = vmatpush1.msra.mxu0 0.0
    %1257 = vmatprep.subr.mxu0 0.0
    %1258 = vmatpush1.msra.mxu0 0.0
    %1259 = vmatprep.subr.mxu0 0.0
    %1260 = vmatpush1.msra.mxu0 0.0
    %1261 = vmatprep.subr.mxu0 0.0
    %1262 = vmatpush1.msra.mxu0 0.0
    %1263 = vmatprep.subr.mxu0 0.0
    %1264 = vmatpush1.msra.mxu0 0.0
    %1265 = vmatprep.subr.mxu0 0.0
    %1266 = vmatpush1.msra.mxu0 0.0
    %1267 = vmatprep.subr.mxu0 0.0
    %1268 = vmatpush1.msra.mxu0 0.0
    %1269 = vmatprep.subr.mxu0 0.0
    %1270 = vmatpush1.msra.mxu0 0.0
    %1271 = vmatprep.subr.mxu0 0.0
    %1272 = vmatpush1.msra.mxu0 0.0
    %1273 = vmatprep.subr.mxu0 0.0
    %1274 = vmatpush1.msra.mxu0 0.0
    %1275 = vmatprep.subr.mxu0 0.0
    %1276 = vmatpush1.msra.mxu0 0.0
    %1277 = vmatprep.subr.mxu0 0.0
    %1278 = vmatpush1.msra.mxu0 0.0
    %1279 = vmatprep.subr.mxu0 0.0
    %1280 = vmatpush1.msra.mxu0 0.0
    %1281 = vmatprep.subr.mxu0 0.0
    %1282 = vmatpush1.msra.mxu0 0.0
    %1283 = vmatprep.subr.mxu0 0.0
    %1284 = vmatpush1.msra.mxu0 0.0
    %1285 = vmatprep.subr.mxu0 0.0
    %1286 = vmatpush1.msra.mxu0 0.0
    %1287 = vmatprep.subr.mxu0 0.0
    %1288 = vmatpush1.msra.mxu0 0.0
    %1289 = vmatprep.subr.mxu0 0.0
    %1290 = vmatpush1.msra.mxu0 0.0
    %1291 = vmatprep.subr.mxu0 0.0
    %1292 = vmatpush1.msra.mxu0 0.0
    %1293 = vmatprep.subr.mxu0 0.0
    %1294 = vmatpush1.msra.mxu0 0.0
    %1295 = vmatprep.subr.mxu0 0.0
    %1296 = vmatpush1.msra.mxu0 0.0
    %1297 = vmatprep.subr.mxu0 0.0
    %1298 = vmatpush1.msra.mxu0 0.0
    %1299 = vmatprep.mubr.f32.mxu0 0.0
    %1300 = vmatmul.mubr.f32.gmra.mrb[0].mxu0 %v1233
    %v1301 = vpop.f32.mrb[0].mxu0
    %v1302 = vadd.f32 0.0, %v1301
    %v1303 = vpop.f32.mrb[0].mxu0
    %1304 = vdwg.mxu0
    %v1306 = vrot.slane %v1302, 6
    %v1308 = vadd.f32 %v1117, %v1306
    %v1309 = vxor.u32 %v1308, 2147483648
    %v1310 = vmul.f32 %v1309, 1.442695
    %v1311 = vpow.pop %v1310
    %v1312 = vadd.f32 %v1311, 1.0
    %v1313 = vrcp.pop %v1312
    %v1314 = vmul.f32 1.0, %v1313
    %v1315 = vadd.f32 %v1302, %v1208
    %v1317 = vrot.slane %v1315, 6
    %1318 = vrot.lane.b32.xlu0 %v1317, 64
    %v1319 = vpop.permute.xlu0 %1318
    %v1321 = vmul.f32 %v1314, %v1319
    %1323 = vrot.lane.b32.xlu0 %v1321, 64
    %v1324 = vpop.permute.xlu0 %1323
    %v1326 = vadd.f32 %v1117, %v1324
    %v1327 = vtanh.pop %v1326
    %v1328 = vsub.f32 1.0, %v1314
    %1330 = vrot.lane.b32.xlu0 %v1327, 96
    %v1331 = vpop.permute.xlu0 %1330
    %v1333 = vmul.f32 %v1328, %v1331
    %v1334 = vrot.slane %v1229, 6
    %v1336 = vmul.f32 %v1314, %v1334
    %v1337 = vadd.f32 %v1333, %v1336
    %v1339 = vrot.slane %v1337, 2
    %1340 = vrot.lane.b32.xlu0 %v1339, 96
    %v1341 = vpop.permute.xlu0 %1340
    %v1342 = vsel %vm155, %v1341, 0
    %1344 = vmatprep.subr.mxu0 0.0
    %1345 = vmatpush1.msra.mxu0 %v1028
    %1346 = vmatprep.subr.mxu0 0.0
    %1347 = vmatpush1.msra.mxu0 %v1029
    %1348 = vmatprep.subr.mxu0 0.0
    %1349 = vmatpush1.msra.mxu0 %v1030
    %1350 = vmatprep.subr.mxu0 0.0
    %1351 = vmatpush1.msra.mxu0 %v1031
    %1352 = vmatprep.subr.mxu0 0.0
    %1353 = vmatpush1.msra.mxu0 0.0
    %1354 = vmatprep.subr.mxu0 0.0
    %1355 = vmatpush1.msra.mxu0 0.0
    %1356 = vmatprep.subr.mxu0 0.0
    %1357 = vmatpush1.msra.mxu0 0.0
    %1358 = vmatprep.subr.mxu0 0.0
    %1359 = vmatpush1.msra.mxu0 0.0
    %1360 = vmatprep.subr.mxu0 0.0
    %1361 = vmatpush1.msra.mxu0 0.0
    %1362 = vmatprep.subr.mxu0 0.0
    %1363 = vmatpush1.msra.mxu0 0.0
    %1364 = vmatprep.subr.mxu0 0.0
    %1365 = vmatpush1.msra.mxu0 0.0
    %1366 = vmatprep.subr.mxu0 0.0
    %1367 = vmatpush1.msra.mxu0 0.0
    %1368 = vmatprep.subr.mxu0 0.0
    %1369 = vmatpush1.msra.mxu0 0.0
    %1370 = vmatprep.subr.mxu0 0.0
    %1371 = vmatpush1.msra.mxu0 0.0
    %1372 = vmatprep.subr.mxu0 0.0
    %1373 = vmatpush1.msra.mxu0 0.0
    %1374 = vmatprep.subr.mxu0 0.0
    %1375 = vmatpush1.msra.mxu0 0.0
    %1376 = vmatprep.subr.mxu0 0.0
    %1377 = vmatpush1.msra.mxu0 0.0
    %1378 = vmatprep.subr.mxu0 0.0
    %1379 = vmatpush1.msra.mxu0 0.0
    %1380 = vmatprep.subr.mxu0 0.0
    %1381 = vmatpush1.msra.mxu0 0.0
    %1382 = vmatprep.subr.mxu0 0.0
    %1383 = vmatpush1.msra.mxu0 0.0
    %1384 = vmatprep.subr.mxu0 0.0
    %1385 = vmatpush1.msra.mxu0 0.0
    %1386 = vmatprep.subr.mxu0 0.0
    %1387 = vmatpush1.msra.mxu0 0.0
    %1388 = vmatprep.subr.mxu0 0.0
    %1389 = vmatpush1.msra.mxu0 0.0
    %1390 = vmatprep.subr.mxu0 0.0
    %1391 = vmatpush1.msra.mxu0 0.0
    %1392 = vmatprep.subr.mxu0 0.0
    %1393 = vmatpush1.msra.mxu0 0.0
    %1394 = vmatprep.subr.mxu0 0.0
    %1395 = vmatpush1.msra.mxu0 0.0
    %1396 = vmatprep.subr.mxu0 0.0
    %1397 = vmatpush1.msra.mxu0 0.0
    %1398 = vmatprep.subr.mxu0 0.0
    %1399 = vmatpush1.msra.mxu0 0.0
    %1400 = vmatprep.subr.mxu0 0.0
    %1401 = vmatpush1.msra.mxu0 0.0
    %1402 = vmatprep.subr.mxu0 0.0
    %1403 = vmatpush1.msra.mxu0 0.0
    %1404 = vmatprep.subr.mxu0 0.0
    %1405 = vmatpush1.msra.mxu0 0.0
    %1406 = vmatprep.subr.mxu0 0.0
    %1407 = vmatpush1.msra.mxu0 0.0
    %1408 = vmatprep.mubr.f32.mxu0 0.0
    %1409 = vmatmul.mubr.f32.gmra.mrb[0].mxu0 %v1342
    %v1410 = vpop.f32.mrb[0].mxu0
    %v1411 = vadd.f32 0.0, %v1410
    %v1412 = vpop.f32.mrb[0].mxu0
    %1413 = vdwg.mxu0
    %v1415 = vrot.slane %v1411, 4
    %v1417 = vadd.f32 %v1117, %v1415
    %v1418 = vxor.u32 %v1417, 2147483648
    %v1419 = vmul.f32 %v1418, 1.442695
    %v1420 = vpow.pop %v1419
    %v1421 = vadd.f32 %v1420, 1.0
    %v1422 = vrcp.pop %v1421
    %v1423 = vmul.f32 1.0, %v1422
    %v1424 = vadd.f32 %v1411, %v1208
    %v1426 = vrot.slane %v1424, 4
    %1427 = vrot.lane.b32.xlu0 %v1426, 64
    %v1428 = vpop.permute.xlu0 %1427
    %v1430 = vmul.f32 %v1423, %v1428
    %1432 = vrot.lane.b32.xlu0 %v1430, 64
    %v1433 = vpop.permute.xlu0 %1432
    %v1435 = vadd.f32 %v1117, %v1433
    %v1436 = vtanh.pop %v1435
    %v1437 = vsub.f32 1.0, %v1423
    %1439 = vrot.lane.b32.xlu0 %v1436, 96
    %v1440 = vpop.permute.xlu0 %1439
    %v1442 = vmul.f32 %v1437, %v1440
    %v1443 = vrot.slane %v1337, 6
    %v1445 = vmul.f32 %v1423, %v1443
    %v1446 = vadd.f32 %v1442, %v1445
    %v1448 = vrot.slane %v1446, 4
    %1449 = vrot.lane.b32.xlu0 %v1448, 96
    %v1450 = vpop.permute.xlu0 %1449
    %v1451 = vsel %vm155, %v1450, 0
    %1453 = vmatprep.subr.mxu0 0.0
    %1454 = vmatpush1.msra.mxu0 %v1028
    %1455 = vmatprep.subr.mxu0 0.0
    %1456 = vmatpush1.msra.mxu0 %v1029
    %1457 = vmatprep.subr.mxu0 0.0
    %1458 = vmatpush1.msra.mxu0 %v1030
    %1459 = vmatprep.subr.mxu0 0.0
    %1460 = vmatpush1.msra.mxu0 %v1031
    %1461 = vmatprep.subr.mxu0 0.0
    %1462 = vmatpush1.msra.mxu0 0.0
    %1463 = vmatprep.subr.mxu0 0.0
    %1464 = vmatpush1.msra.mxu0 0.0
    %1465 = vmatprep.subr.mxu0 0.0
    %1466 = vmatpush1.msra.mxu0 0.0
    %1467 = vmatprep.subr.mxu0 0.0
    %1468 = vmatpush1.msra.mxu0 0.0
    %1469 = vmatprep.subr.mxu0 0.0
    %1470 = vmatpush1.msra.mxu0 0.0
    %1471 = vmatprep.subr.mxu0 0.0
    %1472 = vmatpush1.msra.mxu0 0.0
    %1473 = vmatprep.subr.mxu0 0.0
    %1474 = vmatpush1.msra.mxu0 0.0
    %1475 = vmatprep.subr.mxu0 0.0
    %1476 = vmatpush1.msra.mxu0 0.0
    %1477 = vmatprep.subr.mxu0 0.0
    %1478 = vmatpush1.msra.mxu0 0.0
    %1479 = vmatprep.subr.mxu0 0.0
    %1480 = vmatpush1.msra.mxu0 0.0
    %1481 = vmatprep.subr.mxu0 0.0
    %1482 = vmatpush1.msra.mxu0 0.0
    %1483 = vmatprep.subr.mxu0 0.0
    %1484 = vmatpush1.msra.mxu0 0.0
    %1485 = vmatprep.subr.mxu0 0.0
    %1486 = vmatpush1.msra.mxu0 0.0
    %1487 = vmatprep.subr.mxu0 0.0
    %1488 = vmatpush1.msra.mxu0 0.0
    %1489 = vmatprep.subr.mxu0 0.0
    %1490 = vmatpush1.msra.mxu0 0.0
    %1491 = vmatprep.subr.mxu0 0.0
    %1492 = vmatpush1.msra.mxu0 0.0
    %1493 = vmatprep.subr.mxu0 0.0
    %1494 = vmatpush1.msra.mxu0 0.0
    %1495 = vmatprep.subr.mxu0 0.0
    %1496 = vmatpush1.msra.mxu0 0.0
    %1497 = vmatprep.subr.mxu0 0.0
    %1498 = vmatpush1.msra.mxu0 0.0
    %1499 = vmatprep.subr.mxu0 0.0
    %1500 = vmatpush1.msra.mxu0 0.0
    %1501 = vmatprep.subr.mxu0 0.0
    %1502 = vmatpush1.msra.mxu0 0.0
    %1503 = vmatprep.subr.mxu0 0.0
    %1504 = vmatpush1.msra.mxu0 0.0
    %1505 = vmatprep.subr.mxu0 0.0
    %1506 = vmatpush1.msra.mxu0 0.0
    %1507 = vmatprep.subr.mxu0 0.0
    %1508 = vmatpush1.msra.mxu0 0.0
    %1509 = vmatprep.subr.mxu0 0.0
    %1510 = vmatpush1.msra.mxu0 0.0
    %1511 = vmatprep.subr.mxu0 0.0
    %1512 = vmatpush1.msra.mxu0 0.0
    %1513 = vmatprep.subr.mxu0 0.0
    %1514 = vmatpush1.msra.mxu0 0.0
    %1515 = vmatprep.subr.mxu0 0.0
    %1516 = vmatpush1.msra.mxu0 0.0
    %1517 = vmatprep.mubr.f32.mxu0 0.0
    %1518 = vmatmul.mubr.f32.gmra.mrb[0].mxu0 %v1451
    %v1519 = vpop.f32.mrb[0].mxu0
    %v1520 = vadd.f32 0.0, %v1519
    %v1521 = vpop.f32.mrb[0].mxu0
    %1522 = vdwg.mxu0
    %v1524 = vrot.slane %v1520, 2
    %v1526 = vadd.f32 %v1117, %v1524
    %v1527 = vxor.u32 %v1526, 2147483648
    %v1528 = vmul.f32 %v1527, 1.442695
    %v1529 = vpow.pop %v1528
    %v1530 = vadd.f32 %v1529, 1.0
    %v1531 = vrcp.pop %v1530
    %v1532 = vmul.f32 1.0, %v1531
    %v1533 = vadd.f32 %v1520, %v1208
    %v1535 = vrot.slane %v1533, 2
    %1536 = vrot.lane.b32.xlu0 %v1535, 64
    %v1537 = vpop.permute.xlu0 %1536
    %v1539 = vmul.f32 %v1532, %v1537
    %1541 = vrot.lane.b32.xlu0 %v1539, 64
    %v1542 = vpop.permute.xlu0 %1541
    %v1544 = vadd.f32 %v1117, %v1542
    %v1545 = vtanh.pop %v1544
    %v1546 = vsub.f32 1.0, %v1532
    %1548 = vrot.lane.b32.xlu0 %v1545, 96
    %v1549 = vpop.permute.xlu0 %1548
    %v1551 = vmul.f32 %v1546, %v1549
    %v1552 = vrot.slane %v1446, 6
    %v1554 = vmul.f32 %v1532, %v1552
    %v1555 = vadd.f32 %v1551, %v1554
    %v1557 = vrot.slane %v1555, 6
    %1558 = vrot.lane.b32.xlu0 %v1557, 96
    %v1559 = vpop.permute.xlu0 %1558
    %v1560 = vsel %vm155, %v1559, 0
    %1562 = vmatprep.subr.mxu0 0.0
    %1563 = vmatpush1.msra.mxu0 %v1028
    %1564 = vmatprep.subr.mxu0 0.0
    %1565 = vmatpush1.msra.mxu0 %v1029
    %1566 = vmatprep.subr.mxu0 0.0
    %1567 = vmatpush1.msra.mxu0 %v1030
    %1568 = vmatprep.subr.mxu0 0.0
    %1569 = vmatpush1.msra.mxu0 %v1031
    %1570 = vmatprep.subr.mxu0 0.0
    %1571 = vmatpush1.msra.mxu0 0.0
    %1572 = vmatprep.subr.mxu0 0.0
    %1573 = vmatpush1.msra.mxu0 0.0
    %1574 = vmatprep.subr.mxu0 0.0
    %1575 = vmatpush1.msra.mxu0 0.0
    %1576 = vmatprep.subr.mxu0 0.0
    %1577 = vmatpush1.msra.mxu0 0.0
    %1578 = vmatprep.subr.mxu0 0.0
    %1579 = vmatpush1.msra.mxu0 0.0
    %1580 = vmatprep.subr.mxu0 0.0
    %1581 = vmatpush1.msra.mxu0 0.0
    %1582 = vmatprep.subr.mxu0 0.0
    %1583 = vmatpush1.msra.mxu0 0.0
    %1584 = vmatprep.subr.mxu0 0.0
    %1585 = vmatpush1.msra.mxu0 0.0
    %1586 = vmatprep.subr.mxu0 0.0
    %1587 = vmatpush1.msra.mxu0 0.0
    %1588 = vmatprep.subr.mxu0 0.0
    %1589 = vmatpush1.msra.mxu0 0.0
    %1590 = vmatprep.subr.mxu0 0.0
    %1591 = vmatpush1.msra.mxu0 0.0
    %1592 = vmatprep.subr.mxu0 0.0
    %1593 = vmatpush1.msra.mxu0 0.0
    %1594 = vmatprep.subr.mxu0 0.0
    %1595 = vmatpush1.msra.mxu0 0.0
    %1596 = vmatprep.subr.mxu0 0.0
    %1597 = vmatpush1.msra.mxu0 0.0
    %1598 = vmatprep.subr.mxu0 0.0
    %1599 = vmatpush1.msra.mxu0 0.0
    %1600 = vmatprep.subr.mxu0 0.0
    %1601 = vmatpush1.msra.mxu0 0.0
    %1602 = vmatprep.subr.mxu0 0.0
    %1603 = vmatpush1.msra.mxu0 0.0
    %1604 = vmatprep.subr.mxu0 0.0
    %1605 = vmatpush1.msra.mxu0 0.0
    %1606 = vmatprep.subr.mxu0 0.0
    %1607 = vmatpush1.msra.mxu0 0.0
    %1608 = vmatprep.subr.mxu0 0.0
    %1609 = vmatpush1.msra.mxu0 0.0
    %1610 = vmatprep.subr.mxu0 0.0
    %1611 = vmatpush1.msra.mxu0 0.0
    %1612 = vmatprep.subr.mxu0 0.0
    %1613 = vmatpush1.msra.mxu0 0.0
    %1614 = vmatprep.subr.mxu0 0.0
    %1615 = vmatpush1.msra.mxu0 0.0
    %1616 = vmatprep.subr.mxu0 0.0
    %1617 = vmatpush1.msra.mxu0 0.0
    %1618 = vmatprep.subr.mxu0 0.0
    %1619 = vmatpush1.msra.mxu0 0.0
    %1620 = vmatprep.subr.mxu0 0.0
    %1621 = vmatpush1.msra.mxu0 0.0
    %1622 = vmatprep.subr.mxu0 0.0
    %1623 = vmatpush1.msra.mxu0 0.0
    %1624 = vmatprep.subr.mxu0 0.0
    %1625 = vmatpush1.msra.mxu0 0.0
    %1626 = vmatprep.mubr.f32.mxu0 0.0
    %1627 = vmatmul.mubr.f32.gmra.mrb[0].mxu0 %v1560
    %v1628 = vpop.f32.mrb[0].mxu0
    %v1629 = vadd.f32 0.0, %v1628
    %v1630 = vpop.f32.mrb[0].mxu0
    %1631 = vdwg.mxu0
    %v1632 = vadd.f32 %v1122, %v1629
    %v1633 = vxor.u32 %v1632, 2147483648
    %v1634 = vmul.f32 %v1633, 1.442695
    %v1635 = vpow.pop %v1634
    %v1636 = vadd.f32 %v1635, 1.0
    %v1637 = vrcp.pop %v1636
    %v1638 = vmul.f32 1.0, %v1637
    %v1639 = vadd.f32 %v1629, %v1208
    %1641 = vrot.lane.b32.xlu0 %v1639, 64
    %v1642 = vpop.permute.xlu0 %1641
    %v1644 = vmul.f32 %v1638, %v1642
    %1646 = vrot.lane.b32.xlu0 %v1644, 64
    %v1647 = vpop.permute.xlu0 %1646
    %v1649 = vadd.f32 %v1122, %v1647
    %v1650 = vtanh.pop %v1649
    %v1651 = vsub.f32 1.0, %v1638
    %1653 = vrot.lane.b32.xlu0 %v1650, 96
    %v1654 = vpop.permute.xlu0 %1653
    %v1656 = vmul.f32 %v1651, %v1654
    %v1658 = vmul.f32 %v1638, %v1557
    %v1659 = vadd.f32 %v1656, %v1658
    %1661 = vrot.lane.b32.xlu0 %v1659, 96
    %v1662 = vpop.permute.xlu0 %1661
    %v1663 = vsel %vm155, %v1662, 0
    %1665 = vmatprep.subr.mxu0 0.0
    %1666 = vmatpush1.msra.mxu0 %v1028
    %1667 = vmatprep.subr.mxu0 0.0
    %1668 = vmatpush1.msra.mxu0 %v1029
    %1669 = vmatprep.subr.mxu0 0.0
    %1670 = vmatpush1.msra.mxu0 %v1030
    %1671 = vmatprep.subr.mxu0 0.0
    %1672 = vmatpush1.msra.mxu0 %v1031
    %1673 = vmatprep.subr.mxu0 0.0
    %1674 = vmatpush1.msra.mxu0 0.0
    %1675 = vmatprep.subr.mxu0 0.0
    %1676 = vmatpush1.msra.mxu0 0.0
    %1677 = vmatprep.subr.mxu0 0.0
    %1678 = vmatpush1.msra.mxu0 0.0
    %1679 = vmatprep.subr.mxu0 0.0
    %1680 = vmatpush1.msra.mxu0 0.0
    %1681 = vmatprep.subr.mxu0 0.0
    %1682 = vmatpush1.msra.mxu0 0.0
    %1683 = vmatprep.subr.mxu0 0.0
    %1684 = vmatpush1.msra.mxu0 0.0
    %1685 = vmatprep.subr.mxu0 0.0
    %1686 = vmatpush1.msra.mxu0 0.0
    %1687 = vmatprep.subr.mxu0 0.0
    %1688 = vmatpush1.msra.mxu0 0.0
    %1689 = vmatprep.subr.mxu0 0.0
    %1690 = vmatpush1.msra.mxu0 0.0
    %1691 = vmatprep.subr.mxu0 0.0
    %1692 = vmatpush1.msra.mxu0 0.0
    %1693 = vmatprep.subr.mxu0 0.0
    %1694 = vmatpush1.msra.mxu0 0.0
    %1695 = vmatprep.subr.mxu0 0.0
    %1696 = vmatpush1.msra.mxu0 0.0
    %1697 = vmatprep.subr.mxu0 0.0
    %1698 = vmatpush1.msra.mxu0 0.0
    %1699 = vmatprep.subr.mxu0 0.0
    %1700 = vmatpush1.msra.mxu0 0.0
    %1701 = vmatprep.subr.mxu0 0.0
    %1702 = vmatpush1.msra.mxu0 0.0
    %1703 = vmatprep.subr.mxu0 0.0
    %1704 = vmatpush1.msra.mxu0 0.0
    %1705 = vmatprep.subr.mxu0 0.0
    %1706 = vmatpush1.msra.mxu0 0.0
    %1707 = vmatprep.subr.mxu0 0.0
    %1708 = vmatpush1.msra.mxu0 0.0
    %1709 = vmatprep.subr.mxu0 0.0
    %1710 = vmatpush1.msra.mxu0 0.0
    %1711 = vmatprep.subr.mxu0 0.0
    %1712 = vmatpush1.msra.mxu0 0.0
    %1713 = vmatprep.subr.mxu0 0.0
    %1714 = vmatpush1.msra.mxu0 0.0
    %1715 = vmatprep.subr.mxu0 0.0
    %1716 = vmatpush1.msra.mxu0 0.0
    %1717 = vmatprep.subr.mxu0 0.0
    %1718 = vmatpush1.msra.mxu0 0.0
    %1719 = vmatprep.subr.mxu0 0.0
    %1720 = vmatpush1.msra.mxu0 0.0
    %1721 = vmatprep.subr.mxu0 0.0
    %1722 = vmatpush1.msra.mxu0 0.0
    %1723 = vmatprep.subr.mxu0 0.0
    %1724 = vmatpush1.msra.mxu0 0.0
    %1725 = vmatprep.subr.mxu0 0.0
    %1726 = vmatpush1.msra.mxu0 0.0
    %1727 = vmatprep.subr.mxu0 0.0
    %1728 = vmatpush1.msra.mxu0 0.0
    %1729 = vmatprep.mubr.f32.mxu0 0.0
    %1730 = vmatmul.mubr.f32.gmra.mrb[0].mxu0 %v1663
    %v1731 = vpop.f32.mrb[0].mxu0
    %v1732 = vadd.f32 0.0, %v1731
    %v1733 = vpop.f32.mrb[0].mxu0
    %1734 = vdwg.mxu0
    %v1736 = vrot.slane %v1732, 6
    %v1738 = vadd.f32 %v1122, %v1736
    %v1739 = vxor.u32 %v1738, 2147483648
    %v1740 = vmul.f32 %v1739, 1.442695
    %v1741 = vpow.pop %v1740
    %v1742 = vadd.f32 %v1741, 1.0
    %v1743 = vrcp.pop %v1742
    %v1744 = vmul.f32 1.0, %v1743
    %v1745 = vadd.f32 %v1732, %v1208
    %v1747 = vrot.slane %v1745, 6
    %1748 = vrot.lane.b32.xlu0 %v1747, 64
    %v1749 = vpop.permute.xlu0 %1748
    %v1751 = vmul.f32 %v1744, %v1749
    %1753 = vrot.lane.b32.xlu0 %v1751, 64
    %v1754 = vpop.permute.xlu0 %1753
    %v1756 = vadd.f32 %v1122, %v1754
    %v1757 = vtanh.pop %v1756
    %v1758 = vsub.f32 1.0, %v1744
    %1760 = vrot.lane.b32.xlu0 %v1757, 96
    %v1761 = vpop.permute.xlu0 %1760
    %v1763 = vmul.f32 %v1758, %v1761
    %v1764 = vrot.slane %v1659, 6
    %v1766 = vmul.f32 %v1744, %v1764
    %v1767 = vadd.f32 %v1763, %v1766
    %v1769 = vrot.slane %v1767, 2
    %1770 = vrot.lane.b32.xlu0 %v1769, 96
    %v1771 = vpop.permute.xlu0 %1770
    %v1772 = vsel %vm155, %v1771, 0
    %1774 = vmatprep.subr.mxu0 0.0
    %1775 = vmatpush1.msra.mxu0 %v1028
    %1776 = vmatprep.subr.mxu0 0.0
    %1777 = vmatpush1.msra.mxu0 %v1029
    %1778 = vmatprep.subr.mxu0 0.0
    %1779 = vmatpush1.msra.mxu0 %v1030
    %1780 = vmatprep.subr.mxu0 0.0
    %1781 = vmatpush1.msra.mxu0 %v1031
    %1782 = vmatprep.subr.mxu0 0.0
    %1783 = vmatpush1.msra.mxu0 0.0
    %1784 = vmatprep.subr.mxu0 0.0
    %1785 = vmatpush1.msra.mxu0 0.0
    %1786 = vmatprep.subr.mxu0 0.0
    %1787 = vmatpush1.msra.mxu0 0.0
    %1788 = vmatprep.subr.mxu0 0.0
    %1789 = vmatpush1.msra.mxu0 0.0
    %1790 = vmatprep.subr.mxu0 0.0
    %1791 = vmatpush1.msra.mxu0 0.0
    %1792 = vmatprep.subr.mxu0 0.0
    %1793 = vmatpush1.msra.mxu0 0.0
    %1794 = vmatprep.subr.mxu0 0.0
    %1795 = vmatpush1.msra.mxu0 0.0
    %1796 = vmatprep.subr.mxu0 0.0
    %1797 = vmatpush1.msra.mxu0 0.0
    %1798 = vmatprep.subr.mxu0 0.0
    %1799 = vmatpush1.msra.mxu0 0.0
    %1800 = vmatprep.subr.mxu0 0.0
    %1801 = vmatpush1.msra.mxu0 0.0
    %1802 = vmatprep.subr.mxu0 0.0
    %1803 = vmatpush1.msra.mxu0 0.0
    %1804 = vmatprep.subr.mxu0 0.0
    %1805 = vmatpush1.msra.mxu0 0.0
    %1806 = vmatprep.subr.mxu0 0.0
    %1807 = vmatpush1.msra.mxu0 0.0
    %1808 = vmatprep.subr.mxu0 0.0
    %1809 = vmatpush1.msra.mxu0 0.0
    %1810 = vmatprep.subr.mxu0 0.0
    %1811 = vmatpush1.msra.mxu0 0.0
    %1812 = vmatprep.subr.mxu0 0.0
    %1813 = vmatpush1.msra.mxu0 0.0
    %1814 = vmatprep.subr.mxu0 0.0
    %1815 = vmatpush1.msra.mxu0 0.0
    %1816 = vmatprep.subr.mxu0 0.0
    %1817 = vmatpush1.msra.mxu0 0.0
    %1818 = vmatprep.subr.mxu0 0.0
    %1819 = vmatpush1.msra.mxu0 0.0
    %1820 = vmatprep.subr.mxu0 0.0
    %1821 = vmatpush1.msra.mxu0 0.0
    %1822 = vmatprep.subr.mxu0 0.0
    %1823 = vmatpush1.msra.mxu0 0.0
    %1824 = vmatprep.subr.mxu0 0.0
    %1825 = vmatpush1.msra.mxu0 0.0
    %1826 = vmatprep.subr.mxu0 0.0
    %1827 = vmatpush1.msra.mxu0 0.0
    %1828 = vmatprep.subr.mxu0 0.0
    %1829 = vmatpush1.msra.mxu0 0.0
    %1830 = vmatprep.subr.mxu0 0.0
    %1831 = vmatpush1.msra.mxu0 0.0
    %1832 = vmatprep.subr.mxu0 0.0
    %1833 = vmatpush1.msra.mxu0 0.0
    %1834 = vmatprep.subr.mxu0 0.0
    %1835 = vmatpush1.msra.mxu0 0.0
    %1836 = vmatprep.subr.mxu0 0.0
    %1837 = vmatpush1.msra.mxu0 0.0
    %1838 = vmatprep.mubr.f32.mxu0 0.0
    %1839 = vmatmul.mubr.f32.gmra.mrb[0].mxu0 %v1772
    %v1840 = vpop.f32.mrb[0].mxu0
    %v1841 = vadd.f32 0.0, %v1840
    %v1842 = vpop.f32.mrb[0].mxu0
    %1843 = vdwg.mxu0
    %v1845 = vrot.slane %v1841, 4
    %v1847 = vadd.f32 %v1122, %v1845
    %v1848 = vxor.u32 %v1847, 2147483648
    %v1849 = vmul.f32 %v1848, 1.442695
    %v1850 = vpow.pop %v1849
    %v1851 = vadd.f32 %v1850, 1.0
    %v1852 = vrcp.pop %v1851
    %v1853 = vmul.f32 1.0, %v1852
    %v1854 = vadd.f32 %v1841, %v1208
    %v1856 = vrot.slane %v1854, 4
    %1857 = vrot.lane.b32.xlu0 %v1856, 64
    %v1858 = vpop.permute.xlu0 %1857
    %v1860 = vmul.f32 %v1853, %v1858
    %1862 = vrot.lane.b32.xlu0 %v1860, 64
    %v1863 = vpop.permute.xlu0 %1862
    %v1865 = vadd.f32 %v1122, %v1863
    %v1866 = vtanh.pop %v1865
    %v1867 = vsub.f32 1.0, %v1853
    %1869 = vrot.lane.b32.xlu0 %v1866, 96
    %v1870 = vpop.permute.xlu0 %1869
    %v1872 = vmul.f32 %v1867, %v1870
    %v1873 = vrot.slane %v1767, 6
    %v1875 = vmul.f32 %v1853, %v1873
    %v1876 = vadd.f32 %v1872, %v1875
    %v1878 = vrot.slane %v1876, 4
    %1879 = vrot.lane.b32.xlu0 %v1878, 96
    %v1880 = vpop.permute.xlu0 %1879
    %v1881 = vsel %vm155, %v1880, 0
    %1883 = vmatprep.subr.mxu0 0.0
    %1884 = vmatpush1.msra.mxu0 %v1028
    %1885 = vmatprep.subr.mxu0 0.0
    %1886 = vmatpush1.msra.mxu0 %v1029
    %1887 = vmatprep.subr.mxu0 0.0
    %1888 = vmatpush1.msra.mxu0 %v1030
    %1889 = vmatprep.subr.mxu0 0.0
    %1890 = vmatpush1.msra.mxu0 %v1031
    %1891 = vmatprep.subr.mxu0 0.0
    %1892 = vmatpush1.msra.mxu0 0.0
    %1893 = vmatprep.subr.mxu0 0.0
    %1894 = vmatpush1.msra.mxu0 0.0
    %1895 = vmatprep.subr.mxu0 0.0
    %1896 = vmatpush1.msra.mxu0 0.0
    %1897 = vmatprep.subr.mxu0 0.0
    %1898 = vmatpush1.msra.mxu0 0.0
    %1899 = vmatprep.subr.mxu0 0.0
    %1900 = vmatpush1.msra.mxu0 0.0
    %1901 = vmatprep.subr.mxu0 0.0
    %1902 = vmatpush1.msra.mxu0 0.0
    %1903 = vmatprep.subr.mxu0 0.0
    %1904 = vmatpush1.msra.mxu0 0.0
    %1905 = vmatprep.subr.mxu0 0.0
    %1906 = vmatpush1.msra.mxu0 0.0
    %1907 = vmatprep.subr.mxu0 0.0
    %1908 = vmatpush1.msra.mxu0 0.0
    %1909 = vmatprep.subr.mxu0 0.0
    %1910 = vmatpush1.msra.mxu0 0.0
    %1911 = vmatprep.subr.mxu0 0.0
    %1912 = vmatpush1.msra.mxu0 0.0
    %1913 = vmatprep.subr.mxu0 0.0
    %1914 = vmatpush1.msra.mxu0 0.0
    %1915 = vmatprep.subr.mxu0 0.0
    %1916 = vmatpush1.msra.mxu0 0.0
    %1917 = vmatprep.subr.mxu0 0.0
    %1918 = vmatpush1.msra.mxu0 0.0
    %1919 = vmatprep.subr.mxu0 0.0
    %1920 = vmatpush1.msra.mxu0 0.0
    %1921 = vmatprep.subr.mxu0 0.0
    %1922 = vmatpush1.msra.mxu0 0.0
    %1923 = vmatprep.subr.mxu0 0.0
    %1924 = vmatpush1.msra.mxu0 0.0
    %1925 = vmatprep.subr.mxu0 0.0
    %1926 = vmatpush1.msra.mxu0 0.0
    %1927 = vmatprep.subr.mxu0 0.0
    %1928 = vmatpush1.msra.mxu0 0.0
    %1929 = vmatprep.subr.mxu0 0.0
    %1930 = vmatpush1.msra.mxu0 0.0
    %1931 = vmatprep.subr.mxu0 0.0
    %1932 = vmatpush1.msra.mxu0 0.0
    %1933 = vmatprep.subr.mxu0 0.0
    %1934 = vmatpush1.msra.mxu0 0.0
    %1935 = vmatprep.subr.mxu0 0.0
    %1936 = vmatpush1.msra.mxu0 0.0
    %1937 = vmatprep.subr.mxu0 0.0
    %1938 = vmatpush1.msra.mxu0 0.0
    %1939 = vmatprep.subr.mxu0 0.0
    %1940 = vmatpush1.msra.mxu0 0.0
    %1941 = vmatprep.subr.mxu0 0.0
    %1942 = vmatpush1.msra.mxu0 0.0
    %1943 = vmatprep.subr.mxu0 0.0
    %1944 = vmatpush1.msra.mxu0 0.0
    %1945 = vmatprep.subr.mxu0 0.0
    %1946 = vmatpush1.msra.mxu0 0.0
    %1947 = vmatprep.mubr.f32.mxu0 0.0
    %1948 = vmatmul.mubr.f32.gmra.mrb[0].mxu0 %v1881
    %v1949 = vpop.f32.mrb[0].mxu0
    %v1950 = vadd.f32 0.0, %v1949
    %v1951 = vpop.f32.mrb[0].mxu0
    %1952 = vdwg.mxu0
    %v1954 = vrot.slane %v1950, 2
    %v1956 = vadd.f32 %v1122, %v1954
    %v1957 = vxor.u32 %v1956, 2147483648
    %v1958 = vmul.f32 %v1957, 1.442695
    %v1959 = vpow.pop %v1958
    %v1960 = vadd.f32 %v1959, 1.0
    %v1961 = vrcp.pop %v1960
    %v1962 = vmul.f32 1.0, %v1961
    %v1963 = vadd.f32 %v1950, %v1208
    %v1965 = vrot.slane %v1963, 2
    %1966 = vrot.lane.b32.xlu0 %v1965, 64
    %v1967 = vpop.permute.xlu0 %1966
    %v1969 = vmul.f32 %v1962, %v1967
    %1971 = vrot.lane.b32.xlu0 %v1969, 64
    %v1972 = vpop.permute.xlu0 %1971
    %v1974 = vadd.f32 %v1122, %v1972
    %v1975 = vtanh.pop %v1974
    %v1976 = vsub.f32 1.0, %v1962
    %1978 = vrot.lane.b32.xlu0 %v1975, 96
    %v1979 = vpop.permute.xlu0 %1978
    %v1981 = vmul.f32 %v1976, %v1979
    %v1982 = vrot.slane %v1876, 6
    %v1984 = vmul.f32 %v1962, %v1982
    %v1985 = vadd.f32 %v1981, %v1984
    %v1986 = vsel %vm1015, %v1229, %v1337
    %v1987 = vsel %vm1017, %v1986, %v1446
    %v1988 = vsel %vm1019, %v1987, %v1555
    %v1989 = vsel %vm1015, %v1659, %v1767
    %v1990 = vsel %vm1017, %v1989, %v1876
    %v1991 = vsel %vm1019, %v1990, %v1985
    %v1992 = vld [vmem:[%s9] sm:$0xff]
    %v1993 = vld [vmem:[%s9 + $0x8] sm:$0xff]
    %v1994 = vld [vmem:[%s9 + $0x10] sm:$0xff]
    %v1995 = vld [vmem:[%s9 + $0x18] sm:$0xff]
    %v1996 = vld [vmem:[%s10] sm:$0x1]
    %v1998 = vlaneseq
    %v1999 = vshrl.u32 %v1998, 7
    %v2000 = vsub.s32 0, %v1999
    %v2001 = vrot.slane %v1996, %v2000
    %2005 = vrot.lane.b32.xlu0 %v1988, 96
    %v2006 = vpop.permute.xlu0 %2005
    %2007 = vrot.lane.b32.xlu0 %v1991, 96
    %v2008 = vpop.permute.xlu0 %2007
    %v2009 = vsel %vm155, %v2006, 0
    %v2011 = vsel %vm155, %v2008, 0
    %2013 = vmatprep.subr.mxu0 0.0
    %2014 = vmatpush1.msra.mxu0 %v1992
    %2015 = vmatprep.subr.mxu0 0.0
    %2016 = vmatpush1.msra.mxu0 %v1993
    %2017 = vmatprep.subr.mxu0 0.0
    %2018 = vmatpush1.msra.mxu0 %v1994
    %2019 = vmatprep.subr.mxu0 0.0
    %2020 = vmatpush1.msra.mxu0 %v1995
    %2021 = vmatprep.subr.mxu0 0.0
    %2022 = vmatpush1.msra.mxu0 0.0
    %2023 = vmatprep.subr.mxu0 0.0
    %2024 = vmatpush1.msra.mxu0 0.0
    %2025 = vmatprep.subr.mxu0 0.0
    %2026 = vmatpush1.msra.mxu0 0.0
    %2027 = vmatprep.subr.mxu0 0.0
    %2028 = vmatpush1.msra.mxu0 0.0
    %2029 = vmatprep.subr.mxu0 0.0
    %2030 = vmatpush1.msra.mxu0 0.0
    %2031 = vmatprep.subr.mxu0 0.0
    %2032 = vmatpush1.msra.mxu0 0.0
    %2033 = vmatprep.subr.mxu0 0.0
    %2034 = vmatpush1.msra.mxu0 0.0
    %2035 = vmatprep.subr.mxu0 0.0
    %2036 = vmatpush1.msra.mxu0 0.0
    %2037 = vmatprep.subr.mxu0 0.0
    %2038 = vmatpush1.msra.mxu0 0.0
    %2039 = vmatprep.subr.mxu0 0.0
    %2040 = vmatpush1.msra.mxu0 0.0
    %2041 = vmatprep.subr.mxu0 0.0
    %2042 = vmatpush1.msra.mxu0 0.0
    %2043 = vmatprep.subr.mxu0 0.0
    %2044 = vmatpush1.msra.mxu0 0.0
    %2045 = vmatprep.subr.mxu0 0.0
    %2046 = vmatpush1.msra.mxu0 0.0
    %2047 = vmatprep.subr.mxu0 0.0
    %2048 = vmatpush1.msra.mxu0 0.0
    %2049 = vmatprep.subr.mxu0 0.0
    %2050 = vmatpush1.msra.mxu0 0.0
    %2051 = vmatprep.subr.mxu0 0.0
    %2052 = vmatpush1.msra.mxu0 0.0
    %2053 = vmatprep.subr.mxu0 0.0
    %2054 = vmatpush1.msra.mxu0 0.0
    %2055 = vmatprep.subr.mxu0 0.0
    %2056 = vmatpush1.msra.mxu0 0.0
    %2057 = vmatprep.subr.mxu0 0.0
    %2058 = vmatpush1.msra.mxu0 0.0
    %2059 = vmatprep.subr.mxu0 0.0
    %2060 = vmatpush1.msra.mxu0 0.0
    %2061 = vmatprep.subr.mxu0 0.0
    %2062 = vmatpush1.msra.mxu0 0.0
    %2063 = vmatprep.subr.mxu0 0.0
    %2064 = vmatpush1.msra.mxu0 0.0
    %2065 = vmatprep.subr.mxu0 0.0
    %2066 = vmatpush1.msra.mxu0 0.0
    %2067 = vmatprep.subr.mxu0 0.0
    %2068 = vmatpush1.msra.mxu0 0.0
    %2069 = vmatprep.subr.mxu0 0.0
    %2070 = vmatpush1.msra.mxu0 0.0
    %2071 = vmatprep.subr.mxu0 0.0
    %2072 = vmatpush1.msra.mxu0 0.0
    %2073 = vmatprep.subr.mxu0 0.0
    %2074 = vmatpush1.msra.mxu0 0.0
    %2075 = vmatprep.subr.mxu0 0.0
    %2076 = vmatpush1.msra.mxu0 0.0
    %2077 = vmatprep.mubr.f32.mxu0 0.0
    %2078 = vmatmul.mubr.f32.gmra.mrb[0].mxu0 %v2009
    %v2079 = vpop.f32.mrb[0].mxu0
    %v2080 = vadd.f32 %v2001, %v2079
    %v2081 = vpop.f32.mrb[0].mxu0
    %2082 = vmatprep.mubr.f32.mxu0 0.0
    %2083 = vmatmul.mubr.f32.gmra.mrb[0].mxu0 %v2011
    %v2084 = vpop.f32.mrb[0].mxu0
    %v2085 = vadd.f32 %v2001, %v2084
    %v2086 = vpop.f32.mrb[0].mxu0
    %2087 = vdwg.mxu0
    %v2088 = vxor.u32 %v2080, 2147483648
    %v2089 = vxor.u32 %v2085, 2147483648
    %v2090 = vmul.f32 %v2088, 1.442695
    %v2091 = vpow.pop %v2090
    %v2092 = vmul.f32 %v2089, 1.442695
    %v2093 = vpow.pop %v2092
    %v2094 = vadd.f32 %v2091, 1.0
    %v2095 = vadd.f32 %v2093, 1.0
    %v2096 = vrcp.pop %v2094
    %v2097 = vmul.f32 1.0, %v2096
    %v2098 = vrcp.pop %v2095
    %v2099 = vmul.f32 1.0, %v2098
    %vm2100 = vcmask 31744
    %2101 = vst.msk [vmem:[%s11] sm:$0xff] %vm2100, %v2097
    %2102 = vst.msk [vmem:[%s11 + $0x8] sm:$0xff] %vm2100, %v2099
    // Predicated region
    $region50: #{gru_net_forward.1} parent=1 // pred_check
      _
    $region51: #{gru_net_forward.1} parent=1 // pred_check_branch
      %2104 = sbr.rel (0) target = $region53
    $region52: #{gru_net_forward.1} parent=1 // pred_region
      _
    $region53: #{gru_net_forward.1} parent=1 // pred_fallthru
      _
    // Predicated region
    $region54: #{gru_net_forward.1} parent=1 // pred_check
      _
    $region55: #{gru_net_forward.1} parent=1 // pred_check_branch
      %2106 = sbr.rel (0) target = $region57
    $region56: #{gru_net_forward.1} parent=1 // pred_region
      _
    $region57: #{gru_net_forward.1} parent=1 // pred_fallthru
      _
    %2107 = vsyncpa [#allocation3], 1

</llo_original>
